<compile_context>
chip_gen: v7x
topology: tpu7x:2x2x1
jax: 0.10.0
libtpu: 0.0.40
codegen_flags: <defaults>
</compile_context>

<pallas_src>
import functools

import jax
import jax.numpy as jnp
from jax import lax
from jax.experimental import pallas as pl
from jax.experimental.pallas import tpu as pltpu


# ----------------------------------------------------------------------------
# Fused Pallas kernel: one program per block of `block_b` batch elements
# ----------------------------------------------------------------------------
def _lsa_fused_kernel(scale_ref, x_ref, w_qkv_ref, w_out_ref, b_out_ref, o_ref,
                      *, block_b, heads, dim_head):
    bb = block_b
    n = x_ref.shape[1]
    dim = x_ref.shape[2]
    inner = heads * dim_head
    rows = bb * n
    hb = heads * bb
    cdt = x_ref.dtype                      # compute dtype for MXU inputs

    scale = scale_ref[0]                   # exp(temperature), f32 scalar

    # --- QKV projection on the whole (bb*n)-row slab (fills the MXU M dim) ---
    xf = x_ref[...].reshape(rows, dim)
    qkv = jnp.dot(xf, w_qkv_ref[...],
                  preferred_element_type=jnp.float32)        # (rows, 3*inner)
    qkv = qkv.astype(cdt)

    # --- gather per-head q/k/v into a single (heads*bb, n, dh) batch --------
    # dh-wide lane slices are an unavoidable relayout when dim_head < 128; the
    # total data moved is one pass over qkv and it is done once, outside any
    # loop that holds (n, n) temporaries live.
    def head_batch(which):
        base = which * inner
        parts = [qkv[:, base + h * dim_head: base + (h + 1) * dim_head]
                 .reshape(bb, n, dim_head)            # leading split: free
                 for h in range(heads)]
        return jnp.concatenate(parts, axis=0)         # (hb, n, dh), idx h*bb+b

    q = head_batch(0)
    k = head_batch(1)
    v = head_batch(2)

    # --- attention: heads*batch as a single leading batch dim ---------------
    dots = jnp.einsum("bnd,bmd->bnm", q, k,
                      preferred_element_type=jnp.float32)    # (hb, n, n) f32

    row = lax.broadcasted_iota(jnp.int32, (n, n), 0)
    col = lax.broadcasted_iota(jnp.int32, (n, n), 1)
    neg_diag = jnp.where(row == col, jnp.float32(-1e30), jnp.float32(0.0))
    dots = dots * scale + neg_diag                          # broadcast over hb

    m = jnp.max(dots, axis=-1, keepdims=True)
    e = jnp.exp(dots - m)
    l = jnp.sum(e, axis=-1, keepdims=True)                   # (hb, n, 1)

    o_all = jnp.einsum("bnm,bmd->bnd", e.astype(cdt), v,
                       preferred_element_type=jnp.float32)   # (hb, n, dh) f32
    # deferred softmax normalization: divide the (n, dh) output, not (n, n)
    o_all = o_all * pl.reciprocal(l, approx=True)

    # --- to_out projection: accumulate per-head partials; no concatenate ----
    y = b_out_ref[...].astype(jnp.float32)                   # (1, dim) bias
    for h in range(heads):
        o_h = o_all[h * bb:(h + 1) * bb].reshape(rows, dim_head).astype(cdt)
        w_h = w_out_ref[h * dim_head:(h + 1) * dim_head, :]  # sublane slice
        y = y + jnp.dot(o_h, w_h, preferred_element_type=jnp.float32)

    o_ref[...] = y.reshape(bb, n, dim).astype(o_ref.dtype)


# ----------------------------------------------------------------------------
# Wrapper
# ----------------------------------------------------------------------------
def lsa_forward(x, params, heads):
    """x: (B, N, dim).  params: w_qkv (dim, 3*inner), w_out (inner, dim),
    b_out (dim,), temperature scalar.  Matches torch LSA.forward.
    Pass bf16 x / weights for the bf16 MXU path on v6e/v7x (f32 accumulate)."""
    B, N, dim = x.shape
    w_qkv = params["w_qkv"]
    w_out = params["w_out"]
    b_out = params["b_out"]
    temperature = params["temperature"]

    inner = w_qkv.shape[1] // 3
    assert inner % heads == 0, "inner_dim must be divisible by heads"
    dim_head = inner // heads
    assert N > 1, "N == 1 masks every score (softmax would be NaN)"

    cdt = x.dtype
    w_qkv_c = w_qkv.astype(cdt)
    w_out_c = w_out.astype(cdt)
    b_out2 = b_out.reshape(1, dim).astype(jnp.float32)       # bias stays f32
    scale = jnp.exp(temperature).reshape(1).astype(jnp.float32)

    # ---- generation-aware VMEM budget --------------------------------------
    try:
        vmem_cap = int(pltpu.get_tpu_info().vmem_capacity_bytes)
    except Exception:
        vmem_cap = 64 * 1024 * 1024         # conservative (v7x physical VMEM)
    budget = int(0.75 * vmem_cap)

    isz = jnp.dtype(cdt).itemsize
    osz = jnp.dtype(x.dtype).itemsize
    w_bytes = (dim * 3 * inner + inner * dim) * isz + dim * 4

    def est(bb):
        rows = bb * N
        hb = heads * bb
        blocks = 2 * rows * dim * isz + 2 * rows * dim * osz   # x + out, 2-buf
        tmp = (rows * 3 * inner * (4 + isz)        # qkv f32 + cdt copy
               + 3 * hb * N * dim_head * isz       # q, k, v
               + 2 * hb * N * N * 4                # dots + e
               + hb * N * dim_head * 4             # o_all
               + rows * dim * 4)                   # y accumulator
        # weights counted double-buffered in case Buffered(1) is unavailable
        return blocks + 2 * w_bytes + int(1.5 * tmp)

    # ---- pick the batch-block size ------------------------------------------
    target_rows = 256
    bb = 1
    for d in range(1, B + 1):
        if B % d:
            continue
        if B >= 2 and B // d < 2:
            continue                        # keep both v7x TensorCores busy
        if d * N > 512 or est(d) > budget:
            continue
        bb = d
        if d * N >= target_rows:
            break
    assert est(bb) <= budget, (
        "LSA block does not fit VMEM — "
        "TODO(synk): KV-tiled (flash, online-softmax) path for large N")

    vmem_limit = int(min(budget, max(32 * 1024 * 1024, 2 * est(bb))))
    grid = (B // bb,)

    kernel = functools.partial(_lsa_fused_kernel, block_b=bb, heads=heads,
                               dim_head=dim_head)

    def call(weight_mode):
        def wspec(shape):
            if weight_mode is None:
                return pl.BlockSpec(shape, lambda b: (0,) * len(shape))
            return pl.BlockSpec(shape, lambda b: (0,) * len(shape),
                                pipeline_mode=weight_mode)

        return pl.pallas_call(
            kernel,
            out_shape=jax.ShapeDtypeStruct((B, N, dim), x.dtype),
            grid=grid,
            in_specs=[
                pl.BlockSpec(memory_space=pltpu.MemorySpace.SMEM),   # scale
                pl.BlockSpec((bb, N, dim), lambda b: (b, 0, 0)),     # x
                wspec((dim, 3 * inner)),                             # w_qkv
                wspec((inner, dim)),                                 # w_out
                wspec((1, dim)),                                     # b_out
            ],
            out_specs=pl.BlockSpec((bb, N, dim), lambda b: (b, 0, 0)),
            compiler_params=pltpu.CompilerParams(
                dimension_semantics=("parallel",),
                vmem_limit_bytes=vmem_limit),
        )(scale, x, w_qkv_c, w_out_c, b_out2)

    try:
        # Weight index_maps are constant -> single-buffer them to save VMEM.
        return call(pl.Buffered(1))
    except Exception:
        # TODO(synk): pl.Buffered(1) rejected on this jax version; fall back.
        return call(None)


# ----------------------------------------------------------------------------
# Pure-JAX reference (mirrors the torch module)
# ----------------------------------------------------------------------------
def lsa_reference(x, params, heads):
    B, N, dim = x.shape
    w_qkv, w_out, b_out = params["w_qkv"], params["w_out"], params["b_out"]
    inner = w_qkv.shape[1] // 3
    dh = inner // heads
    qkv = x @ w_qkv
    q, k, v = jnp.split(qkv, 3, axis=-1)
    q, k, v = (t.reshape(B, N, heads, dh).transpose(0, 2, 1, 3)
               for t in (q, k, v))
    dots = jnp.einsum("bhnd,bhmd->bhnm", q, k) * jnp.exp(params["temperature"])
    eye = jnp.eye(N, dtype=bool)
    dots = jnp.where(eye, -jnp.finfo(jnp.float32).max, dots)
    attn = jax.nn.softmax(dots, axis=-1)
    out = jnp.einsum("bhnm,bhmd->bhnd", attn, v)
    out = out.transpose(0, 2, 1, 3).reshape(B, N, inner)
    return out @ w_out + b_out


# ----------------------------------------------------------------------------
if __name__ == "__main__":
    B, N, dim, heads, dim_head = 2, 8, 32, 4, 16
    inner = heads * dim_head

    key = jax.random.PRNGKey(0)
    k1, k2, k3, k4 = jax.random.split(key, 4)
    x = jax.random.normal(k1, (B, N, dim), dtype=jnp.float32)
    # torch stores Linear weights as (out, in); we keep the transposed layout.
    w_qkv = jax.random.normal(k2, (dim, inner * 3), dtype=jnp.float32) * 0.05
    w_out = jax.random.normal(k3, (inner, dim), dtype=jnp.float32) * 0.05
    b_out = jax.random.normal(k4, (dim,), dtype=jnp.float32) * 0.05
    temperature = jnp.log(jnp.asarray(dim_head, jnp.float32) ** -0.5)

    params = dict(w_qkv=w_qkv, w_out=w_out, b_out=b_out,
                  temperature=temperature)

    # f32 path: correctness against the pure-JAX reference.
    y = lsa_forward(x, params, heads)
    jax.block_until_ready(y)
    y_ref = lsa_reference(x, params, heads)
    assert y.shape == (B, N, dim)
    assert jnp.allclose(y, y_ref, atol=2e-3, rtol=2e-3), "mismatch vs reference"

    # bf16 path (v6e/v7x MXU fast path, f32 accumulation): loose check only.
    params_bf16 = dict(w_qkv=w_qkv.astype(jnp.bfloat16),
                       w_out=w_out.astype(jnp.bfloat16),
                       b_out=b_out, temperature=temperature)
    y_bf16 = lsa_forward(x.astype(jnp.bfloat16), params_bf16, heads)
    jax.block_until_ready(y_bf16)
    y_bf16_f32 = y_bf16.astype(jnp.float32)
    assert jnp.all(jnp.isfinite(y_bf16_f32))
    assert jnp.allclose(y_bf16_f32, y_ref, atol=5e-2, rtol=5e-2), "bf16 drift"

    print("KERNEL_OK")
</pallas_src>

<mosaic_0001>
module attributes {stable_mosaic.version = 11 : i64} {
  func.func @_lsa_fused_kernel(%arg0: i32, %arg1: memref<1xf32, #tpu.memory_space<smem>>, %arg2: memref<1x8x32xf32, #tpu.memory_space<vmem>>, %arg3: memref<32x192xf32, #tpu.memory_space<vmem>>, %arg4: memref<64x32xf32, #tpu.memory_space<vmem>>, %arg5: memref<1x32xf32, #tpu.memory_space<vmem>>, %arg6: memref<1x8x32xf32, #tpu.memory_space<vmem>>) attributes {dimension_semantics = [#tpu.dimension_semantics<parallel>], iteration_bounds = array<i64: 2>, scalar_prefetch = 0 : i64, scratch_operands = 0 : i64, tpu.core_type = #tpu.core_type<tc>, window_params = [{transform_indices = @transform_0, window_bounds = array<i64: 1>}, {transform_indices = @transform_1, window_bounds = array<i64: 1, 8, 32>}, {pipeline_mode = #tpu.pipeline_mode<synchronous>, transform_indices = @transform_2, window_bounds = array<i64: 32, 192>}, {pipeline_mode = #tpu.pipeline_mode<synchronous>, transform_indices = @transform_3, window_bounds = array<i64: 64, 32>}, {pipeline_mode = #tpu.pipeline_mode<synchronous>, transform_indices = @transform_4, window_bounds = array<i64: 1, 32>}, {transform_indices = @transform_5, window_bounds = array<i64: 1, 8, 32>}]} {
    %c0 = arith.constant 0 : index
    %0 = memref.load %arg1[%c0] : memref<1xf32, #tpu.memory_space<smem>>
    %c0_0 = arith.constant 0 : index
    %c0_1 = arith.constant 0 : index
    %c0_2 = arith.constant 0 : index
    %1 = vector.load %arg2[%c0_0, %c0_1, %c0_2] : memref<1x8x32xf32, #tpu.memory_space<vmem>>, vector<1x8x32xf32>
    %2 = vector.shape_cast %1 : vector<1x8x32xf32> to vector<8x32xf32>
    %c0_3 = arith.constant 0 : index
    %c0_4 = arith.constant 0 : index
    %3 = vector.load %arg3[%c0_3, %c0_4] : memref<32x192xf32, #tpu.memory_space<vmem>>, vector<32x192xf32>
    %cst = arith.constant dense<0.000000e+00> : vector<8x192xf32>
    %4 = tpu.matmul %2, %3, %cst {dimension_numbers = #tpu.dot_dimension_numbers<[1], [0], [0], [1], [0, 0, 1, 1], [], []>} : vector<8x32xf32>, vector<32x192xf32>, vector<8x192xf32> -> vector<8x192xf32>
    %5 = vector.extract_strided_slice %4 {offsets = [0, 0], sizes = [8, 16], strides = [1, 1]} : vector<8x192xf32> to vector<8x16xf32>
    %6 = vector.shape_cast %5 : vector<8x16xf32> to vector<1x8x16xf32>
    %7 = vector.extract_strided_slice %4 {offsets = [0, 16], sizes = [8, 16], strides = [1, 1]} : vector<8x192xf32> to vector<8x16xf32>
    %8 = vector.shape_cast %7 : vector<8x16xf32> to vector<1x8x16xf32>
    %9 = vector.extract_strided_slice %4 {offsets = [0, 32], sizes = [8, 16], strides = [1, 1]} : vector<8x192xf32> to vector<8x16xf32>
    %10 = vector.shape_cast %9 : vector<8x16xf32> to vector<1x8x16xf32>
    %11 = vector.extract_strided_slice %4 {offsets = [0, 48], sizes = [8, 16], strides = [1, 1]} : vector<8x192xf32> to vector<8x16xf32>
    %12 = vector.shape_cast %11 : vector<8x16xf32> to vector<1x8x16xf32>
    %13 = tpu.concatenate %6, %8, %10, %12 in 0 : vector<1x8x16xf32>, vector<1x8x16xf32>, vector<1x8x16xf32>, vector<1x8x16xf32> -> vector<4x8x16xf32>
    %14 = vector.extract_strided_slice %4 {offsets = [0, 64], sizes = [8, 16], strides = [1, 1]} : vector<8x192xf32> to vector<8x16xf32>
    %15 = vector.shape_cast %14 : vector<8x16xf32> to vector<1x8x16xf32>
    %16 = vector.extract_strided_slice %4 {offsets = [0, 80], sizes = [8, 16], strides = [1, 1]} : vector<8x192xf32> to vector<8x16xf32>
    %17 = vector.shape_cast %16 : vector<8x16xf32> to vector<1x8x16xf32>
    %18 = vector.extract_strided_slice %4 {offsets = [0, 96], sizes = [8, 16], strides = [1, 1]} : vector<8x192xf32> to vector<8x16xf32>
    %19 = vector.shape_cast %18 : vector<8x16xf32> to vector<1x8x16xf32>
    %20 = vector.extract_strided_slice %4 {offsets = [0, 112], sizes = [8, 16], strides = [1, 1]} : vector<8x192xf32> to vector<8x16xf32>
    %21 = vector.shape_cast %20 : vector<8x16xf32> to vector<1x8x16xf32>
    %22 = tpu.concatenate %15, %17, %19, %21 in 0 : vector<1x8x16xf32>, vector<1x8x16xf32>, vector<1x8x16xf32>, vector<1x8x16xf32> -> vector<4x8x16xf32>
    %23 = vector.extract_strided_slice %4 {offsets = [0, 128], sizes = [8, 16], strides = [1, 1]} : vector<8x192xf32> to vector<8x16xf32>
    %24 = vector.shape_cast %23 : vector<8x16xf32> to vector<1x8x16xf32>
    %25 = vector.extract_strided_slice %4 {offsets = [0, 144], sizes = [8, 16], strides = [1, 1]} : vector<8x192xf32> to vector<8x16xf32>
    %26 = vector.shape_cast %25 : vector<8x16xf32> to vector<1x8x16xf32>
    %27 = vector.extract_strided_slice %4 {offsets = [0, 160], sizes = [8, 16], strides = [1, 1]} : vector<8x192xf32> to vector<8x16xf32>
    %28 = vector.shape_cast %27 : vector<8x16xf32> to vector<1x8x16xf32>
    %29 = vector.extract_strided_slice %4 {offsets = [0, 176], sizes = [8, 16], strides = [1, 1]} : vector<8x192xf32> to vector<8x16xf32>
    %30 = vector.shape_cast %29 : vector<8x16xf32> to vector<1x8x16xf32>
    %31 = tpu.concatenate %24, %26, %28, %30 in 0 : vector<1x8x16xf32>, vector<1x8x16xf32>, vector<1x8x16xf32>, vector<1x8x16xf32> -> vector<4x8x16xf32>
    "tpu.trace_start"() <{level = 10 : i32, message = "bnd,bmd->bnm"}> : () -> ()
    %cst_5 = arith.constant dense<0.000000e+00> : vector<4x8x8xf32>
    %32 = tpu.matmul %13, %22, %cst_5 {dimension_numbers = #tpu.dot_dimension_numbers<[2], [2], [1], [1], [0, 0, 0, 1, 1, 1], [0], [0]>} : vector<4x8x16xf32>, vector<4x8x16xf32>, vector<4x8x8xf32> -> vector<4x8x8xf32>
    "tpu.trace_stop"() : () -> ()
    %33 = tpu.iota {dimensions = array<i32: 0>} : vector<8x8xi32>
    %34 = tpu.iota {dimensions = array<i32: 1>} : vector<8x8xi32>
    %35 = arith.cmpi eq, %33, %34 : vector<8x8xi32>
    %cst_6 = arith.constant -1.000000e+30 : f32
    %cst_7 = arith.constant 0.000000e+00 : f32
    %36 = vector.broadcast %cst_6 : f32 to vector<8x8xf32>
    %37 = vector.broadcast %cst_7 : f32 to vector<8x8xf32>
    %38 = arith.select %35, %36, %37 : vector<8x8xi1>, vector<8x8xf32>
    %39 = vector.broadcast %0 : f32 to vector<4x8x8xf32>
    %40 = arith.mulf %32, %39 : vector<4x8x8xf32>
    %41 = vector.shape_cast %38 : vector<8x8xf32> to vector<1x8x8xf32>
    %42 = vector.broadcast %41 : vector<1x8x8xf32> to vector<4x8x8xf32>
    %43 = arith.addf %40, %42 : vector<4x8x8xf32>
    %cst_8 = arith.constant dense<0xFF800000> : vector<4x8xf32>
    %44 = vector.multi_reduction <maximumf>, %43, %cst_8 [2] : vector<4x8x8xf32> to vector<4x8xf32>
    %45 = vector.shape_cast %44 : vector<4x8xf32> to vector<4x8x1xf32>
    %46 = vector.broadcast %45 : vector<4x8x1xf32> to vector<4x8x8xf32>
    %47 = arith.subf %43, %46 : vector<4x8x8xf32>
    %48 = math.exp %47 : vector<4x8x8xf32>
    %cst_9 = arith.constant dense<0.000000e+00> : vector<4x8xf32>
    %49 = vector.multi_reduction <add>, %48, %cst_9 [2] : vector<4x8x8xf32> to vector<4x8xf32>
    %50 = vector.shape_cast %49 : vector<4x8xf32> to vector<4x8x1xf32>
    "tpu.trace_start"() <{level = 10 : i32, message = "bnm,bmd->bnd"}> : () -> ()
    %cst_10 = arith.constant dense<0.000000e+00> : vector<4x8x16xf32>
    %51 = tpu.matmul %48, %31, %cst_10 {dimension_numbers = #tpu.dot_dimension_numbers<[2], [1], [1], [2], [0, 0, 0, 1, 1, 2], [0], [0]>} : vector<4x8x8xf32>, vector<4x8x16xf32>, vector<4x8x16xf32> -> vector<4x8x16xf32>
    "tpu.trace_stop"() : () -> ()
    %52 = tpu.reciprocal %50 {approx = true} : vector<4x8x1xf32> -> vector<4x8x1xf32>
    %53 = vector.broadcast %52 : vector<4x8x1xf32> to vector<4x8x16xf32>
    %54 = arith.mulf %51, %53 : vector<4x8x16xf32>
    %c0_11 = arith.constant 0 : index
    %c0_12 = arith.constant 0 : index
    %55 = vector.load %arg5[%c0_11, %c0_12] : memref<1x32xf32, #tpu.memory_space<vmem>>, vector<1x32xf32>
    %56 = vector.extract_strided_slice %54 {offsets = [0, 0, 0], sizes = [1, 8, 16], strides = [1, 1, 1]} : vector<4x8x16xf32> to vector<1x8x16xf32>
    %57 = vector.shape_cast %56 : vector<1x8x16xf32> to vector<8x16xf32>
    %c0_13 = arith.constant 0 : index
    %c0_14 = arith.constant 0 : index
    %58 = vector.load %arg4[%c0_13, %c0_14] : memref<64x32xf32, #tpu.memory_space<vmem>>, vector<16x32xf32>
    %cst_15 = arith.constant dense<0.000000e+00> : vector<8x32xf32>
    %59 = tpu.matmul %57, %58, %cst_15 {dimension_numbers = #tpu.dot_dimension_numbers<[1], [0], [0], [1], [0, 0, 1, 1], [], []>} : vector<8x16xf32>, vector<16x32xf32>, vector<8x32xf32> -> vector<8x32xf32>
    %60 = vector.broadcast %55 : vector<1x32xf32> to vector<8x32xf32>
    %61 = arith.addf %60, %59 : vector<8x32xf32>
    %62 = vector.extract_strided_slice %54 {offsets = [1, 0, 0], sizes = [1, 8, 16], strides = [1, 1, 1]} : vector<4x8x16xf32> to vector<1x8x16xf32>
    %63 = vector.shape_cast %62 : vector<1x8x16xf32> to vector<8x16xf32>
    %c16 = arith.constant 16 : index
    %c0_16 = arith.constant 0 : index
    %64 = vector.load %arg4[%c16, %c0_16] : memref<64x32xf32, #tpu.memory_space<vmem>>, vector<16x32xf32>
    %cst_17 = arith.constant dense<0.000000e+00> : vector<8x32xf32>
    %65 = tpu.matmul %63, %64, %cst_17 {dimension_numbers = #tpu.dot_dimension_numbers<[1], [0], [0], [1], [0, 0, 1, 1], [], []>} : vector<8x16xf32>, vector<16x32xf32>, vector<8x32xf32> -> vector<8x32xf32>
    %66 = arith.addf %61, %65 : vector<8x32xf32>
    %67 = vector.extract_strided_slice %54 {offsets = [2, 0, 0], sizes = [1, 8, 16], strides = [1, 1, 1]} : vector<4x8x16xf32> to vector<1x8x16xf32>
    %68 = vector.shape_cast %67 : vector<1x8x16xf32> to vector<8x16xf32>
    %c32 = arith.constant 32 : index
    %c0_18 = arith.constant 0 : index
    %69 = vector.load %arg4[%c32, %c0_18] : memref<64x32xf32, #tpu.memory_space<vmem>>, vector<16x32xf32>
    %cst_19 = arith.constant dense<0.000000e+00> : vector<8x32xf32>
    %70 = tpu.matmul %68, %69, %cst_19 {dimension_numbers = #tpu.dot_dimension_numbers<[1], [0], [0], [1], [0, 0, 1, 1], [], []>} : vector<8x16xf32>, vector<16x32xf32>, vector<8x32xf32> -> vector<8x32xf32>
    %71 = arith.addf %66, %70 : vector<8x32xf32>
    %72 = vector.extract_strided_slice %54 {offsets = [3, 0, 0], sizes = [1, 8, 16], strides = [1, 1, 1]} : vector<4x8x16xf32> to vector<1x8x16xf32>
    %73 = vector.shape_cast %72 : vector<1x8x16xf32> to vector<8x16xf32>
    %c48 = arith.constant 48 : index
    %c0_20 = arith.constant 0 : index
    %74 = vector.load %arg4[%c48, %c0_20] : memref<64x32xf32, #tpu.memory_space<vmem>>, vector<16x32xf32>
    %cst_21 = arith.constant dense<0.000000e+00> : vector<8x32xf32>
    %75 = tpu.matmul %73, %74, %cst_21 {dimension_numbers = #tpu.dot_dimension_numbers<[1], [0], [0], [1], [0, 0, 1, 1], [], []>} : vector<8x16xf32>, vector<16x32xf32>, vector<8x32xf32> -> vector<8x32xf32>
    %76 = arith.addf %71, %75 : vector<8x32xf32>
    %77 = vector.shape_cast %76 : vector<8x32xf32> to vector<1x8x32xf32>
    %c0_22 = arith.constant 0 : index
    %c0_23 = arith.constant 0 : index
    %c0_24 = arith.constant 0 : index
    %78 = vector.load %arg6[%c0_22, %c0_23, %c0_24] : memref<1x8x32xf32, #tpu.memory_space<vmem>>, vector<1x8x32xf32>
    tpu.vector_store %arg6[%c0_22, %c0_23, %c0_24], %77 {strides = array<i32>} : memref<1x8x32xf32, #tpu.memory_space<vmem>>, vector<1x8x32xf32>,
    return
  }
  func.func @transform_0(%arg0: i32) -> i32 {
    %c0_i32 = arith.constant 0 : i32
    %c0_i32_0 = arith.constant 0 : i32
    return %c0_i32 : i32
  }
  func.func @transform_1(%arg0: i32) -> (i32, i32, i32) {
    %c0_i32 = arith.constant 0 : i32
    %c0_i32_0 = arith.constant 0 : i32
    %c0_i32_1 = arith.constant 0 : i32
    return %arg0, %c0_i32, %c0_i32_0 : i32, i32, i32
  }
  func.func @transform_2(%arg0: i32) -> (i32, i32) {
    %c0_i32 = arith.constant 0 : i32
    %c0_i32_0 = arith.constant 0 : i32
    %c0_i32_1 = arith.constant 0 : i32
    return %c0_i32, %c0_i32_0 : i32, i32
  }
  func.func @transform_3(%arg0: i32) -> (i32, i32) {
    %c0_i32 = arith.constant 0 : i32
    %c0_i32_0 = arith.constant 0 : i32
    %c0_i32_1 = arith.constant 0 : i32
    return %c0_i32, %c0_i32_0 : i32, i32
  }
  func.func @transform_4(%arg0: i32) -> (i32, i32) {
    %c0_i32 = arith.constant 0 : i32
    %c0_i32_0 = arith.constant 0 : i32
    %c0_i32_1 = arith.constant 0 : i32
    return %c0_i32, %c0_i32_0 : i32, i32
  }
  func.func @transform_5(%arg0: i32) -> (i32, i32, i32) {
    %c0_i32 = arith.constant 0 : i32
    %c0_i32_0 = arith.constant 0 : i32
    %c0_i32_1 = arith.constant 0 : i32
    return %arg0, %c0_i32, %c0_i32_0 : i32, i32, i32
  }
}

module attributes {stable_mosaic.version = 11 : i64} {
  func.func @_lsa_fused_kernel(%arg0: i32, %arg1: memref<1xf32, #tpu.memory_space<smem>>, %arg2: memref<1x8x32xf32, #tpu.memory_space<vmem>>, %arg3: memref<32x192xf32, #tpu.memory_space<vmem>>, %arg4: memref<64x32xf32, #tpu.memory_space<vmem>>, %arg5: memref<1x32xf32, #tpu.memory_space<vmem>>, %arg6: memref<1x8x32xf32, #tpu.memory_space<vmem>>) attributes {dimension_semantics = [#tpu.dimension_semantics<parallel>], iteration_bounds = array<i64: 2>, scalar_prefetch = 0 : i64, scratch_operands = 0 : i64, tpu.core_type = #tpu.core_type<tc>, window_params = [{transform_indices = @transform_0, window_bounds = array<i64: 1>}, {transform_indices = @transform_1, window_bounds = array<i64: 1, 8, 32>}, {pipeline_mode = #tpu.pipeline_mode<synchronous>, transform_indices = @transform_2, window_bounds = array<i64: 32, 192>}, {pipeline_mode = #tpu.pipeline_mode<synchronous>, transform_indices = @transform_3, window_bounds = array<i64: 64, 32>}, {pipeline_mode = #tpu.pipeline_mode<synchronous>, transform_indices = @transform_4, window_bounds = array<i64: 1, 32>}, {transform_indices = @transform_5, window_bounds = array<i64: 1, 8, 32>}]} {
    %c0 = arith.constant 0 : index
    %0 = memref.load %arg1[%c0] : memref<1xf32, #tpu.memory_space<smem>>
    %c0_0 = arith.constant 0 : index
    %c0_1 = arith.constant 0 : index
    %c0_2 = arith.constant 0 : index
    %1 = vector.load %arg2[%c0_0, %c0_1, %c0_2] : memref<1x8x32xf32, #tpu.memory_space<vmem>>, vector<1x8x32xf32>
    %2 = vector.shape_cast %1 : vector<1x8x32xf32> to vector<8x32xf32>
    %c0_3 = arith.constant 0 : index
    %c0_4 = arith.constant 0 : index
    %3 = vector.load %arg3[%c0_3, %c0_4] : memref<32x192xf32, #tpu.memory_space<vmem>>, vector<32x192xf32>
    %cst = arith.constant dense<0.000000e+00> : vector<8x192xf32>
    %4 = tpu.matmul %2, %3, %cst {dimension_numbers = #tpu.dot_dimension_numbers<[1], [0], [0], [1], [0, 0, 1, 1], [], []>} : vector<8x32xf32>, vector<32x192xf32>, vector<8x192xf32> -> vector<8x192xf32>
    %5 = vector.extract_strided_slice %4 {offsets = [0, 0], sizes = [8, 16], strides = [1, 1]} : vector<8x192xf32> to vector<8x16xf32>
    %6 = vector.shape_cast %5 : vector<8x16xf32> to vector<1x8x16xf32>
    %7 = vector.extract_strided_slice %4 {offsets = [0, 16], sizes = [8, 16], strides = [1, 1]} : vector<8x192xf32> to vector<8x16xf32>
    %8 = vector.shape_cast %7 : vector<8x16xf32> to vector<1x8x16xf32>
    %9 = vector.extract_strided_slice %4 {offsets = [0, 32], sizes = [8, 16], strides = [1, 1]} : vector<8x192xf32> to vector<8x16xf32>
    %10 = vector.shape_cast %9 : vector<8x16xf32> to vector<1x8x16xf32>
    %11 = vector.extract_strided_slice %4 {offsets = [0, 48], sizes = [8, 16], strides = [1, 1]} : vector<8x192xf32> to vector<8x16xf32>
    %12 = vector.shape_cast %11 : vector<8x16xf32> to vector<1x8x16xf32>
    %13 = tpu.concatenate %6, %8, %10, %12 in 0 : vector<1x8x16xf32>, vector<1x8x16xf32>, vector<1x8x16xf32>, vector<1x8x16xf32> -> vector<4x8x16xf32>
    %14 = vector.extract_strided_slice %4 {offsets = [0, 64], sizes = [8, 16], strides = [1, 1]} : vector<8x192xf32> to vector<8x16xf32>
    %15 = vector.shape_cast %14 : vector<8x16xf32> to vector<1x8x16xf32>
    %16 = vector.extract_strided_slice %4 {offsets = [0, 80], sizes = [8, 16], strides = [1, 1]} : vector<8x192xf32> to vector<8x16xf32>
    %17 = vector.shape_cast %16 : vector<8x16xf32> to vector<1x8x16xf32>
    %18 = vector.extract_strided_slice %4 {offsets = [0, 96], sizes = [8, 16], strides = [1, 1]} : vector<8x192xf32> to vector<8x16xf32>
    %19 = vector.shape_cast %18 : vector<8x16xf32> to vector<1x8x16xf32>
    %20 = vector.extract_strided_slice %4 {offsets = [0, 112], sizes = [8, 16], strides = [1, 1]} : vector<8x192xf32> to vector<8x16xf32>
    %21 = vector.shape_cast %20 : vector<8x16xf32> to vector<1x8x16xf32>
    %22 = tpu.concatenate %15, %17, %19, %21 in 0 : vector<1x8x16xf32>, vector<1x8x16xf32>, vector<1x8x16xf32>, vector<1x8x16xf32> -> vector<4x8x16xf32>
    %23 = vector.extract_strided_slice %4 {offsets = [0, 128], sizes = [8, 16], strides = [1, 1]} : vector<8x192xf32> to vector<8x16xf32>
    %24 = vector.shape_cast %23 : vector<8x16xf32> to vector<1x8x16xf32>
    %25 = vector.extract_strided_slice %4 {offsets = [0, 144], sizes = [8, 16], strides = [1, 1]} : vector<8x192xf32> to vector<8x16xf32>
    %26 = vector.shape_cast %25 : vector<8x16xf32> to vector<1x8x16xf32>
    %27 = vector.extract_strided_slice %4 {offsets = [0, 160], sizes = [8, 16], strides = [1, 1]} : vector<8x192xf32> to vector<8x16xf32>
    %28 = vector.shape_cast %27 : vector<8x16xf32> to vector<1x8x16xf32>
    %29 = vector.extract_strided_slice %4 {offsets = [0, 176], sizes = [8, 16], strides = [1, 1]} : vector<8x192xf32> to vector<8x16xf32>
    %30 = vector.shape_cast %29 : vector<8x16xf32> to vector<1x8x16xf32>
    %31 = tpu.concatenate %24, %26, %28, %30 in 0 : vector<1x8x16xf32>, vector<1x8x16xf32>, vector<1x8x16xf32>, vector<1x8x16xf32> -> vector<4x8x16xf32>
    "tpu.trace_start"() <{level = 10 : i32, message = "bnd,bmd->bnm"}> : () -> ()
    %cst_5 = arith.constant dense<0.000000e+00> : vector<4x8x8xf32>
    %32 = tpu.matmul %13, %22, %cst_5 {dimension_numbers = #tpu.dot_dimension_numbers<[2], [2], [1], [1], [0, 0, 0, 1, 1, 1], [0], [0]>} : vector<4x8x16xf32>, vector<4x8x16xf32>, vector<4x8x8xf32> -> vector<4x8x8xf32>
    "tpu.trace_stop"() : () -> ()
    %33 = tpu.iota {dimensions = array<i32: 0>} : vector<8x8xi32>
    %34 = tpu.iota {dimensions = array<i32: 1>} : vector<8x8xi32>
    %35 = arith.cmpi eq, %33, %34 : vector<8x8xi32>
    %cst_6 = arith.constant -1.000000e+30 : f32
    %cst_7 = arith.constant 0.000000e+00 : f32
    %36 = vector.broadcast %cst_6 : f32 to vector<8x8xf32>
    %37 = vector.broadcast %cst_7 : f32 to vector<8x8xf32>
    %38 = arith.select %35, %36, %37 : vector<8x8xi1>, vector<8x8xf32>
    %39 = vector.broadcast %0 : f32 to vector<4x8x8xf32>
    %40 = arith.mulf %32, %39 : vector<4x8x8xf32>
    %41 = vector.shape_cast %38 : vector<8x8xf32> to vector<1x8x8xf32>
    %42 = vector.broadcast %41 : vector<1x8x8xf32> to vector<4x8x8xf32>
    %43 = arith.addf %40, %42 : vector<4x8x8xf32>
    %cst_8 = arith.constant dense<0xFF800000> : vector<4x8xf32>
    %44 = vector.multi_reduction <maximumf>, %43, %cst_8 [2] : vector<4x8x8xf32> to vector<4x8xf32>
    %45 = vector.shape_cast %44 : vector<4x8xf32> to vector<4x8x1xf32>
    %46 = vector.broadcast %45 : vector<4x8x1xf32> to vector<4x8x8xf32>
    %47 = arith.subf %43, %46 : vector<4x8x8xf32>
    %48 = math.exp %47 : vector<4x8x8xf32>
    %cst_9 = arith.constant dense<0.000000e+00> : vector<4x8xf32>
    %49 = vector.multi_reduction <add>, %48, %cst_9 [2] : vector<4x8x8xf32> to vector<4x8xf32>
    %50 = vector.shape_cast %49 : vector<4x8xf32> to vector<4x8x1xf32>
    "tpu.trace_start"() <{level = 10 : i32, message = "bnm,bmd->bnd"}> : () -> ()
    %cst_10 = arith.constant dense<0.000000e+00> : vector<4x8x16xf32>
    %51 = tpu.matmul %48, %31, %cst_10 {dimension_numbers = #tpu.dot_dimension_numbers<[2], [1], [1], [2], [0, 0, 0, 1, 1, 2], [0], [0]>} : vector<4x8x8xf32>, vector<4x8x16xf32>, vector<4x8x16xf32> -> vector<4x8x16xf32>
    "tpu.trace_stop"() : () -> ()
    %52 = tpu.reciprocal %50 {approx = true} : vector<4x8x1xf32> -> vector<4x8x1xf32>
    %53 = vector.broadcast %52 : vector<4x8x1xf32> to vector<4x8x16xf32>
    %54 = arith.mulf %51, %53 : vector<4x8x16xf32>
    %c0_11 = arith.constant 0 : index
    %c0_12 = arith.constant 0 : index
    %55 = vector.load %arg5[%c0_11, %c0_12] : memref<1x32xf32, #tpu.memory_space<vmem>>, vector<1x32xf32>
    %56 = vector.extract_strided_slice %54 {offsets = [0, 0, 0], sizes = [1, 8, 16], strides = [1, 1, 1]} : vector<4x8x16xf32> to vector<1x8x16xf32>
    %57 = vector.shape_cast %56 : vector<1x8x16xf32> to vector<8x16xf32>
    %c0_13 = arith.constant 0 : index
    %c0_14 = arith.constant 0 : index
    %58 = vector.load %arg4[%c0_13, %c0_14] : memref<64x32xf32, #tpu.memory_space<vmem>>, vector<16x32xf32>
    %cst_15 = arith.constant dense<0.000000e+00> : vector<8x32xf32>
    %59 = tpu.matmul %57, %58, %cst_15 {dimension_numbers = #tpu.dot_dimension_numbers<[1], [0], [0], [1], [0, 0, 1, 1], [], []>} : vector<8x16xf32>, vector<16x32xf32>, vector<8x32xf32> -> vector<8x32xf32>
    %60 = vector.broadcast %55 : vector<1x32xf32> to vector<8x32xf32>
    %61 = arith.addf %60, %59 : vector<8x32xf32>
    %62 = vector.extract_strided_slice %54 {offsets = [1, 0, 0], sizes = [1, 8, 16], strides = [1, 1, 1]} : vector<4x8x16xf32> to vector<1x8x16xf32>
    %63 = vector.shape_cast %62 : vector<1x8x16xf32> to vector<8x16xf32>
    %c16 = arith.constant 16 : index
    %c0_16 = arith.constant 0 : index
    %64 = vector.load %arg4[%c16, %c0_16] : memref<64x32xf32, #tpu.memory_space<vmem>>, vector<16x32xf32>
    %cst_17 = arith.constant dense<0.000000e+00> : vector<8x32xf32>
    %65 = tpu.matmul %63, %64, %cst_17 {dimension_numbers = #tpu.dot_dimension_numbers<[1], [0], [0], [1], [0, 0, 1, 1], [], []>} : vector<8x16xf32>, vector<16x32xf32>, vector<8x32xf32> -> vector<8x32xf32>
    %66 = arith.addf %61, %65 : vector<8x32xf32>
    %67 = vector.extract_strided_slice %54 {offsets = [2, 0, 0], sizes = [1, 8, 16], strides = [1, 1, 1]} : vector<4x8x16xf32> to vector<1x8x16xf32>
    %68 = vector.shape_cast %67 : vector<1x8x16xf32> to vector<8x16xf32>
    %c32 = arith.constant 32 : index
    %c0_18 = arith.constant 0 : index
    %69 = vector.load %arg4[%c32, %c0_18] : memref<64x32xf32, #tpu.memory_space<vmem>>, vector<16x32xf32>
    %cst_19 = arith.constant dense<0.000000e+00> : vector<8x32xf32>
    %70 = tpu.matmul %68, %69, %cst_19 {dimension_numbers = #tpu.dot_dimension_numbers<[1], [0], [0], [1], [0, 0, 1, 1], [], []>} : vector<8x16xf32>, vector<16x32xf32>, vector<8x32xf32> -> vector<8x32xf32>
    %71 = arith.addf %66, %70 : vector<8x32xf32>
    %72 = vector.extract_strided_slice %54 {offsets = [3, 0, 0], sizes = [1, 8, 16], strides = [1, 1, 1]} : vector<4x8x16xf32> to vector<1x8x16xf32>
    %73 = vector.shape_cast %72 : vector<1x8x16xf32> to vector<8x16xf32>
    %c48 = arith.constant 48 : index
    %c0_20 = arith.constant 0 : index
    %74 = vector.load %arg4[%c48, %c0_20] : memref<64x32xf32, #tpu.memory_space<vmem>>, vector<16x32xf32>
    %cst_21 = arith.constant dense<0.000000e+00> : vector<8x32xf32>
    %75 = tpu.matmul %73, %74, %cst_21 {dimension_numbers = #tpu.dot_dimension_numbers<[1], [0], [0], [1], [0, 0, 1, 1], [], []>} : vector<8x16xf32>, vector<16x32xf32>, vector<8x32xf32> -> vector<8x32xf32>
    %76 = arith.addf %71, %75 : vector<8x32xf32>
    %77 = vector.shape_cast %76 : vector<8x32xf32> to vector<1x8x32xf32>
    %c0_22 = arith.constant 0 : index
    %c0_23 = arith.constant 0 : index
    %c0_24 = arith.constant 0 : index
    %78 = vector.load %arg6[%c0_22, %c0_23, %c0_24] : memref<1x8x32xf32, #tpu.memory_space<vmem>>, vector<1x8x32xf32>
    tpu.vector_store %arg6[%c0_22, %c0_23, %c0_24], %77 {strides = array<i32>} : memref<1x8x32xf32, #tpu.memory_space<vmem>>, vector<1x8x32xf32>,
    return
  }
  func.func @transform_0(%arg0: i32) -> i32 {
    %c0_i32 = arith.constant 0 : i32
    %c0_i32_0 = arith.constant 0 : i32
    return %c0_i32 : i32
  }
  func.func @transform_1(%arg0: i32) -> (i32, i32, i32) {
    %c0_i32 = arith.constant 0 : i32
    %c0_i32_0 = arith.constant 0 : i32
    %c0_i32_1 = arith.constant 0 : i32
    return %arg0, %c0_i32, %c0_i32_0 : i32, i32, i32
  }
  func.func @transform_2(%arg0: i32) -> (i32, i32) {
    %c0_i32 = arith.constant 0 : i32
    %c0_i32_0 = arith.constant 0 : i32
    %c0_i32_1 = arith.constant 0 : i32
    return %c0_i32, %c0_i32_0 : i32, i32
  }
  func.func @transform_3(%arg0: i32) -> (i32, i32) {
    %c0_i32 = arith.constant 0 : i32
    %c0_i32_0 = arith.constant 0 : i32
    %c0_i32_1 = arith.constant 0 : i32
    return %c0_i32, %c0_i32_0 : i32, i32
  }
  func.func @transform_4(%arg0: i32) -> (i32, i32) {
    %c0_i32 = arith.constant 0 : i32
    %c0_i32_0 = arith.constant 0 : i32
    %c0_i32_1 = arith.constant 0 : i32
    return %c0_i32, %c0_i32_0 : i32, i32
  }
  func.func @transform_5(%arg0: i32) -> (i32, i32, i32) {
    %c0_i32 = arith.constant 0 : i32
    %c0_i32_0 = arith.constant 0 : i32
    %c0_i32_1 = arith.constant 0 : i32
    return %arg0, %c0_i32, %c0_i32_0 : i32, i32, i32
  }
}

</mosaic_0001>

<llo_original>
// kernel: tpu_custom_call.1
$region0: #{tpu_custom_call.1}
  #allocation0 [shape = 'u32[]', space=smem, size = 0x4, offset = 0x4, fixed_abs, tag = 'smem constant byte address 0x4 - core index']
  #allocation1 [shape = 'u32[144,128]{1,0:T(1,128)}', space=vmem, size = 0x12000, scoped, tag = 'internal scratch']
  #allocation2 [shape = 'f32[1]{0:T(128)S(6)}', space=smem, size = 0x200, scoped, tag = 'scoped memory for tpu_custom_call.1']
  %s0 = inlined_call_operand.<no memory space> [shape: f32[1], index: 0, kind: input, shape index: {}]
  %s1 = inlined_call_operand.vmem [shape: f32[2,8,32], index: 1, kind: input, shape index: {}]
  %s2 = inlined_call_operand.vmem [shape: f32[32,192], index: 2, kind: input, shape index: {}]
  %s3 = inlined_call_operand.vmem [shape: f32[64,32], index: 3, kind: input, shape index: {}]
  %s4 = inlined_call_operand.vmem [shape: f32[1,32], index: 4, kind: input, shape index: {}]
  %s5 = inlined_call_operand.hbm [shape: f32[2,8,32], index: 5, kind: output, shape index: {}]
  %s6 = sld [smem:[#allocation0]]
  $region53: #{tpu_custom_call.1} parent=0
    _
  %s8 = ssub.s32 1, %s6
  %s9 = scalar_select 0, %s8, %s6
  %10 = sst [smem:[#allocation2]] %s0
  $region1: #{tpu_custom_call.1} parent=0
    #allocation3 [shape = 'u8[8192]{0}', space=vmem, size = 0x2000, scoped, tag = 'output window, operand 0']
    #allocation4 [shape = 's32[2]{0}', space=sflag, size = 0x8, scoped, tag = 'scoped memory for tpu_custom_call.1']
    %11 = vsyncpa [#allocation4], 0
    %s12 = scalar_lea.sflag [#allocation4], 1
    %13 = vsyncpa %s12, 0
    loop: start=0, step=1, limit=4
    $region2: #{tpu_custom_call.1} parent=1 // loop_pre_header
      _
    $region3: #{tpu_custom_call.1} parent=1 // loop_header
      %s15 = sphi 0, %s19
      %p16 = scmp.ge.s32.totalorder %s15, 4
      %s23 = sphi 0, %s23
      %s25 = sphi 0, %s23
      %s26 = sphi 0, %s25
      %s40 = sphi 0, %s26
      %s46 = sphi 0, %s48
      %s49 = sphi 0, %s46
      %s50 = sphi 0, %s49
      %s66 = sphi 0, %s50
      %s70 = sphi 0, %s70
      %s72 = sphi 0, %s70
      %s73 = sphi 0, %s72
      %s87 = sphi 0, %s73
      %s91 = sphi 0, %s91
      %s93 = sphi 0, %s91
      %s94 = sphi 0, %s93
      %s108 = sphi 0, %s94
      %s112 = sphi 0, %s112
      %s114 = sphi 0, %s112
      %s115 = sphi 0, %s114
      %s129 = sphi 0, %s115
      %s135 = sphi 0, %s137
      %s138 = sphi 0, %s135
      %s139 = sphi 0, %s138
      %s155 = sphi 0, %s139
    $region4: #{tpu_custom_call.1} parent=1 // loop_header_branch
      %18 = sbr.rel (%p16) target = $region8
    $region5: #{tpu_custom_call.1} parent=1 // loop_body
      %s20 = ssub.s32 %s15, 1
      %s21 = ssub.s32 %s15, 2
      %s22 = sadd.s32 %s15, 1
      %s24 = sadd.s32 %s23, 1
      %p27 = scmp.eq.s32.totalorder %s15, 1
      %p28 = scmp.ne.s32.totalorder %s23, %s25
      %p29 = scmp.eq.s32.totalorder %s15, 0
      %p30 = por %p28, %p29
      %p31 = scmp.ne.s32.totalorder %s23, %s25
      %p32 = scmp.eq.s32.totalorder %s20, 1
      %p33 = por %p31, %p32
      %p34 = scmp.ne.s32.totalorder %s25, %s26
      %p35 = scmp.eq.s32.totalorder %s20, 0
      %p36 = por %p34, %p35
      %p37 = scmp.ne.s32.totalorder %s25, %s26
      %p38 = scmp.eq.s32.totalorder %s21, 1
      %p39 = por %p37, %p38
      %p41 = scmp.ne.s32.totalorder %s26, %s40
      %p42 = scmp.eq.s32.totalorder %s21, 0
      %p43 = por %p41, %p42
      %s44 = ssub.s32 %s15, %s22
      %p45 = scmp.eq.s32.totalorder %s44, 0
      %s47 = sadd.s32 %s46, 1
      %s48 = scalar_select %p45, %s46, %s47
      %p51 = pneg %p45
      %p52 = scmp.eq.s32.totalorder %s15, 1
      %p53 = por %p51, %p52
      %p54 = scmp.ne.s32.totalorder %s46, %s49
      %p55 = scmp.eq.s32.totalorder %s15, 0
      %p56 = por %p54, %p55
      %p57 = scmp.ne.s32.totalorder %s46, %s49
      %p58 = scmp.eq.s32.totalorder %s20, 1
      %p59 = por %p57, %p58
      %p60 = scmp.ne.s32.totalorder %s49, %s50
      %p61 = scmp.eq.s32.totalorder %s20, 0
      %p62 = por %p60, %p61
      %p63 = scmp.ne.s32.totalorder %s49, %s50
      %p64 = scmp.eq.s32.totalorder %s21, 1
      %p65 = por %p63, %p64
      %p67 = scmp.ne.s32.totalorder %s50, %s66
      %p68 = scmp.eq.s32.totalorder %s21, 0
      %p69 = por %p67, %p68
      %s71 = sadd.s32 %s70, 1
      %p74 = scmp.eq.s32.totalorder %s15, 1
      %p75 = scmp.ne.s32.totalorder %s70, %s72
      %p76 = scmp.eq.s32.totalorder %s15, 0
      %p77 = por %p75, %p76
      %p78 = scmp.ne.s32.totalorder %s70, %s72
      %p79 = scmp.eq.s32.totalorder %s20, 1
      %p80 = por %p78, %p79
      %p81 = scmp.ne.s32.totalorder %s72, %s73
      %p82 = scmp.eq.s32.totalorder %s20, 0
      %p83 = por %p81, %p82
      %p84 = scmp.ne.s32.totalorder %s72, %s73
      %p85 = scmp.eq.s32.totalorder %s21, 1
      %p86 = por %p84, %p85
      %p88 = scmp.ne.s32.totalorder %s73, %s87
      %p89 = scmp.eq.s32.totalorder %s21, 0
      %p90 = por %p88, %p89
      %s92 = sadd.s32 %s91, 1
      %p95 = scmp.eq.s32.totalorder %s15, 1
      %p96 = scmp.ne.s32.totalorder %s91, %s93
      %p97 = scmp.eq.s32.totalorder %s15, 0
      %p98 = por %p96, %p97
      %p99 = scmp.ne.s32.totalorder %s91, %s93
      %p100 = scmp.eq.s32.totalorder %s20, 1
      %p101 = por %p99, %p100
      %p102 = scmp.ne.s32.totalorder %s93, %s94
      %p103 = scmp.eq.s32.totalorder %s20, 0
      %p104 = por %p102, %p103
      %p105 = scmp.ne.s32.totalorder %s93, %s94
      %p106 = scmp.eq.s32.totalorder %s21, 1
      %p107 = por %p105, %p106
      %p109 = scmp.ne.s32.totalorder %s94, %s108
      %p110 = scmp.eq.s32.totalorder %s21, 0
      %p111 = por %p109, %p110
      %s113 = sadd.s32 %s112, 1
      %p116 = scmp.eq.s32.totalorder %s15, 1
      %p117 = scmp.ne.s32.totalorder %s112, %s114
      %p118 = scmp.eq.s32.totalorder %s15, 0
      %p119 = por %p117, %p118
      %p120 = scmp.ne.s32.totalorder %s112, %s114
      %p121 = scmp.eq.s32.totalorder %s20, 1
      %p122 = por %p120, %p121
      %p123 = scmp.ne.s32.totalorder %s114, %s115
      %p124 = scmp.eq.s32.totalorder %s20, 0
      %p125 = por %p123, %p124
      %p126 = scmp.ne.s32.totalorder %s114, %s115
      %p127 = scmp.eq.s32.totalorder %s21, 1
      %p128 = por %p126, %p127
      %p130 = scmp.ne.s32.totalorder %s115, %s129
      %p131 = scmp.eq.s32.totalorder %s21, 0
      %p132 = por %p130, %p131
      %s133 = ssub.s32 %s15, %s22
      %p134 = scmp.eq.s32.totalorder %s133, 0
      %s136 = sadd.s32 %s135, 1
      %s137 = scalar_select %p134, %s135, %s136
      %p140 = pneg %p134
      %p141 = scmp.eq.s32.totalorder %s15, 1
      %p142 = por %p140, %p141
      %p143 = scmp.ne.s32.totalorder %s135, %s138
      %p144 = scmp.eq.s32.totalorder %s15, 0
      %p145 = por %p143, %p144
      %p146 = scmp.ne.s32.totalorder %s135, %s138
      %p147 = scmp.eq.s32.totalorder %s20, 1
      %p148 = por %p146, %p147
      %p149 = scmp.ne.s32.totalorder %s138, %s139
      %p150 = scmp.eq.s32.totalorder %s20, 0
      %p151 = por %p149, %p150
      %p152 = scmp.ne.s32.totalorder %s138, %s139
      %p153 = scmp.eq.s32.totalorder %s21, 1
      %p154 = por %p152, %p153
      %p156 = scmp.ne.s32.totalorder %s139, %s155
      %p157 = scmp.eq.s32.totalorder %s21, 0
      %p158 = por %p156, %p157
      %p159 = scmp.le.s32.totalorder 1, %s15
      %p160 = scmp.lt.s32.totalorder %s15, 3
      %p161 = pnand %p159, %p160
      %p162 = pneg %p161
      // Predicated region
      $region9: #{tpu_custom_call.1} parent=5 // pred_check
        _
      $region10: #{tpu_custom_call.1} parent=5 // pred_check_branch
        %164 = sbr.rel (%p161) target = $region12
      $region11: #{tpu_custom_call.1} parent=5 // pred_region
        %s165 = ssub.s32 %s15, 1
        // Predicated region
        $region13: #{tpu_custom_call.1} parent=11 // pred_check
          %p166 = pneg %p36
        $region14: #{tpu_custom_call.1} parent=11 // pred_check_branch
          %168 = sbr.rel (%p166) target = $region16
        $region15: #{tpu_custom_call.1} parent=11 // pred_region
          _
        $region16: #{tpu_custom_call.1} parent=11 // pred_fallthru
          _
        // Predicated region
        $region17: #{tpu_custom_call.1} parent=11 // pred_check
          %p169 = pneg %p83
        $region18: #{tpu_custom_call.1} parent=11 // pred_check_branch
          %171 = sbr.rel (%p169) target = $region20
        $region19: #{tpu_custom_call.1} parent=11 // pred_region
          _
        $region20: #{tpu_custom_call.1} parent=11 // pred_fallthru
          _
        // Predicated region
        $region21: #{tpu_custom_call.1} parent=11 // pred_check
          %p172 = pneg %p104
        $region22: #{tpu_custom_call.1} parent=11 // pred_check_branch
          %174 = sbr.rel (%p172) target = $region24
        $region23: #{tpu_custom_call.1} parent=11 // pred_region
          _
        $region24: #{tpu_custom_call.1} parent=11 // pred_fallthru
          _
        // Predicated region
        $region25: #{tpu_custom_call.1} parent=11 // pred_check
          %p175 = pneg %p125
        $region26: #{tpu_custom_call.1} parent=11 // pred_check_branch
          %177 = sbr.rel (%p175) target = $region28
        $region27: #{tpu_custom_call.1} parent=11 // pred_region
          _
        $region28: #{tpu_custom_call.1} parent=11 // pred_fallthru
          _
      $region12: #{tpu_custom_call.1} parent=5 // pred_fallthru
        _
      %p178 = scmp.lt.s32.totalorder %s15, 2
      // Predicated region
      $region29: #{tpu_custom_call.1} parent=5 // pred_check
        %p179 = pneg %p178
      $region30: #{tpu_custom_call.1} parent=5 // pred_check_branch
        %181 = sbr.rel (%p179) target = $region32
      $region31: #{tpu_custom_call.1} parent=5 // pred_region
        // Predicated region
        $region33: #{tpu_custom_call.1} parent=31 // pred_check
          %p182 = pneg %p56
        $region34: #{tpu_custom_call.1} parent=31 // pred_check_branch
          %184 = sbr.rel (%p182) target = $region36
        $region35: #{tpu_custom_call.1} parent=31 // pred_region
          %p185 = scmp.lt.s32.totalorder %s15, 1
          %s186 = scalar_select %p185, %s15, 1
          %s187 = smul.addr %s186, 8
          %s188 = scalar_lea.vmem %s1, %s187
        $region36: #{tpu_custom_call.1} parent=31 // pred_fallthru
          _
      $region32: #{tpu_custom_call.1} parent=5 // pred_fallthru
        _
      %p189 = scmp.le.s32.totalorder 1, %s15
      %p190 = scmp.lt.s32.totalorder %s15, 3
      %p191 = pnand %p189, %p190
      %p192 = pneg %p191
      // Predicated region
      $region37: #{tpu_custom_call.1} parent=5 // pred_check
        _
      $region38: #{tpu_custom_call.1} parent=5 // pred_check_branch
        %194 = sbr.rel (%p191) target = $region40
      $region39: #{tpu_custom_call.1} parent=5 // pred_region
        %s195 = ssub.s32 %s15, 1
        %p196 = pneg %p36
        %p197 = pneg %p33
        %p198 = scmp.lt.s32.totalorder %s20, 1
        %s199 = scalar_select %p198, %s20, 1
        %s200 = smul.addr %s199, 8
        %s201 = scalar_lea.vmem %s1, %s200
        %p202 = pneg %p62
        %p203 = pneg %p59
        %p204 = pneg %p83
        %p205 = pneg %p80
        %p206 = pneg %p104
        %p207 = pneg %p101
        %p208 = pneg %p125
        %p209 = pneg %p122
        %p210 = pneg %p151
        %p211 = pneg %p148
        %s212 = sand.u32 %s138, 1
        %s213 = scalar_lea.sflag [#allocation4], %s212
        %s214 = sand.u32 %s138, 1
        %s215 = smul.addr %s214, 8
        %s216 = scalar_lea.vmem [#allocation3], %s215
        %p217 = scmp.lt.s32.totalorder %s20, 1
        %s218 = scalar_select %p217, %s20, 1
        %s219 = smul.addr %s218, 8
        %s220 = scalar_lea.vmem %s1, %s219
        %s221 = sld [smem:[#allocation2]]
        %v222 = vld [vmem:[%s220] sm:$0xff]
        %v223 = vld [vmem:[%s2] sm:$0xff]
        %v224 = vld [vmem:[%s2 + $0x8] sm:$0xff]
        %v225 = vld [vmem:[%s2 + $0x10] sm:$0xff]
        %v226 = vld [vmem:[%s2 + $0x18] sm:$0xff]
        %v227 = vld [vmem:[%s2 + $0x20] sm:$0xff]
        %v228 = vld [vmem:[%s2 + $0x28] sm:$0xff]
        %v229 = vld [vmem:[%s2 + $0x30] sm:$0xff]
        %v230 = vld [vmem:[%s2 + $0x38] sm:$0xff]
        %vm231 = vcmask 261120
        %v233 = vsel %vm231, %v222, 0
        %235 = vmatprep.subr.mxu0 %v224
        %236 = vmatpush1.msra.mxu0 %v223
        %237 = vmatprep.subr.mxu0 %v226
        %238 = vmatpush1.msra.mxu0 %v225
        %239 = vmatprep.subr.mxu0 %v228
        %240 = vmatpush1.msra.mxu0 %v227
        %241 = vmatprep.subr.mxu0 %v230
        %242 = vmatpush1.msra.mxu0 %v229
        %243 = vmatprep.subr.mxu0 0.0
        %244 = vmatpush1.msra.mxu0 0.0
        %245 = vmatprep.subr.mxu0 0.0
        %246 = vmatpush1.msra.mxu0 0.0
        %247 = vmatprep.subr.mxu0 0.0
        %248 = vmatpush1.msra.mxu0 0.0
        %249 = vmatprep.subr.mxu0 0.0
        %250 = vmatpush1.msra.mxu0 0.0
        %251 = vmatprep.subr.mxu0 0.0
        %252 = vmatpush1.msra.mxu0 0.0
        %253 = vmatprep.subr.mxu0 0.0
        %254 = vmatpush1.msra.mxu0 0.0
        %255 = vmatprep.subr.mxu0 0.0
        %256 = vmatpush1.msra.mxu0 0.0
        %257 = vmatprep.subr.mxu0 0.0
        %258 = vmatpush1.msra.mxu0 0.0
        %259 = vmatprep.subr.mxu0 0.0
        %260 = vmatpush1.msra.mxu0 0.0
        %261 = vmatprep.subr.mxu0 0.0
        %262 = vmatpush1.msra.mxu0 0.0
        %263 = vmatprep.subr.mxu0 0.0
        %264 = vmatpush1.msra.mxu0 0.0
        %265 = vmatprep.subr.mxu0 0.0
        %266 = vmatpush1.msra.mxu0 0.0
        %267 = vmatprep.subr.mxu0 0.0
        %268 = vmatpush1.msra.mxu0 0.0
        %269 = vmatprep.subr.mxu0 0.0
        %270 = vmatpush1.msra.mxu0 0.0
        %271 = vmatprep.subr.mxu0 0.0
        %272 = vmatpush1.msra.mxu0 0.0
        %273 = vmatprep.subr.mxu0 0.0
        %274 = vmatpush1.msra.mxu0 0.0
        %275 = vmatprep.subr.mxu0 0.0
        %276 = vmatpush1.msra.mxu0 0.0
        %277 = vmatprep.subr.mxu0 0.0
        %278 = vmatpush1.msra.mxu0 0.0
        %279 = vmatprep.subr.mxu0 0.0
        %280 = vmatpush1.msra.mxu0 0.0
        %281 = vmatprep.subr.mxu0 0.0
        %282 = vmatpush1.msra.mxu0 0.0
        %283 = vmatprep.subr.mxu0 0.0
        %284 = vmatpush1.msra.mxu0 0.0
        %285 = vmatprep.subr.mxu0 0.0
        %286 = vmatpush1.msra.mxu0 0.0
        %287 = vmatprep.subr.mxu0 0.0
        %288 = vmatpush1.msra.mxu0 0.0
        %289 = vmatprep.subr.mxu0 0.0
        %290 = vmatpush1.msra.mxu0 0.0
        %291 = vmatprep.subr.mxu0 0.0
        %292 = vmatpush1.msra.mxu0 0.0
        %293 = vmatprep.subr.mxu0 0.0
        %294 = vmatpush1.msra.mxu0 0.0
        %295 = vmatprep.subr.mxu0 0.0
        %296 = vmatpush1.msra.mxu0 0.0
        %297 = vmatprep.subr.mxu0 0.0
        %298 = vmatpush1.msra.mxu0 0.0
        %299 = vmatprep.mubr.f32.mxu0 0.0
        %300 = vmatmul.mubr.f32.gmra.mrb[0].mxu0 %v233
        %v301 = vpop.f32.mrb[0].mxu0
        %v302 = vadd.f32 0.0, %v301
        %v303 = vpop.f32.mrb[0].mxu0
        %v304 = vadd.f32 0.0, %v303
        %305 = vdwg.mxu0
        %307 = vrot.lane.b32.xlu0 %v302, 112
        %v308 = vpop.permute.xlu0 %307
        %309 = vrot.lane.b32.xlu0 %v302, 96
        %v310 = vpop.permute.xlu0 %309
        %311 = vrot.lane.b32.xlu0 %v302, 80
        %v312 = vpop.permute.xlu0 %311
        %314 = vrot.lane.b32.xlu0 %v304, 112
        %v315 = vpop.permute.xlu0 %314
        %317 = vrot.lane.b32.xlu0 %v304, 96
        %v318 = vpop.permute.xlu0 %317
        %320 = vrot.lane.b32.xlu0 %v304, 80
        %v321 = vpop.permute.xlu0 %320
        %323 = vrot.lane.b32.xlu0 %v302, 64
        %v324 = vpop.permute.xlu0 %323
        %vm325 = vcmask 130048
        %v326 = vsel %vm325, %v302, 0
        %v328 = vsel %vm325, %v324, 0
        %330 = vmatprep.subr.mxu0 0.0
        %331 = vmatpush1.xpose.msra.mxu0 %v328
        %332 = vmatprep.subr.mxu0 0.0
        %333 = vmatpush1.xpose.msra.mxu0 0.0
        %334 = vmatprep.subr.mxu0 0.0
        %335 = vmatpush1.xpose.msra.mxu0 0.0
        %336 = vmatprep.subr.mxu0 0.0
        %337 = vmatpush1.xpose.msra.mxu0 0.0
        %338 = vmatprep.subr.mxu0 0.0
        %339 = vmatpush1.xpose.msra.mxu0 0.0
        %340 = vmatprep.subr.mxu0 0.0
        %341 = vmatpush1.xpose.msra.mxu0 0.0
        %342 = vmatprep.subr.mxu0 0.0
        %343 = vmatpush1.xpose.msra.mxu0 0.0
        %344 = vmatprep.subr.mxu0 0.0
        %345 = vmatpush1.xpose.msra.mxu0 0.0
        %346 = vmatprep.subr.mxu0 0.0
        %347 = vmatpush1.xpose.msra.mxu0 0.0
        %348 = vmatprep.subr.mxu0 0.0
        %349 = vmatpush1.xpose.msra.mxu0 0.0
        %350 = vmatprep.subr.mxu0 0.0
        %351 = vmatpush1.xpose.msra.mxu0 0.0
        %352 = vmatprep.subr.mxu0 0.0
        %353 = vmatpush1.xpose.msra.mxu0 0.0
        %354 = vmatprep.subr.mxu0 0.0
        %355 = vmatpush1.xpose.msra.mxu0 0.0
        %356 = vmatprep.subr.mxu0 0.0
        %357 = vmatpush1.xpose.msra.mxu0 0.0
        %358 = vmatprep.subr.mxu0 0.0
        %359 = vmatpush1.xpose.msra.mxu0 0.0
        %360 = vmatprep.subr.mxu0 0.0
        %361 = vmatpush1.xpose.msra.mxu0 0.0
        %362 = vmatprep.subr.mxu0 0.0
        %363 = vmatpush1.xpose.msra.mxu0 0.0
        %364 = vmatprep.subr.mxu0 0.0
        %365 = vmatpush1.xpose.msra.mxu0 0.0
        %366 = vmatprep.subr.mxu0 0.0
        %367 = vmatpush1.xpose.msra.mxu0 0.0
        %368 = vmatprep.subr.mxu0 0.0
        %369 = vmatpush1.xpose.msra.mxu0 0.0
        %370 = vmatprep.subr.mxu0 0.0
        %371 = vmatpush1.xpose.msra.mxu0 0.0
        %372 = vmatprep.subr.mxu0 0.0
        %373 = vmatpush1.xpose.msra.mxu0 0.0
        %374 = vmatprep.subr.mxu0 0.0
        %375 = vmatpush1.xpose.msra.mxu0 0.0
        %376 = vmatprep.subr.mxu0 0.0
        %377 = vmatpush1.xpose.msra.mxu0 0.0
        %378 = vmatprep.subr.mxu0 0.0
        %379 = vmatpush1.xpose.msra.mxu0 0.0
        %380 = vmatprep.subr.mxu0 0.0
        %381 = vmatpush1.xpose.msra.mxu0 0.0
        %382 = vmatprep.subr.mxu0 0.0
        %383 = vmatpush1.xpose.msra.mxu0 0.0
        %384 = vmatprep.subr.mxu0 0.0
        %385 = vmatpush1.xpose.msra.mxu0 0.0
        %386 = vmatprep.subr.mxu0 0.0
        %387 = vmatpush1.xpose.msra.mxu0 0.0
        %388 = vmatprep.subr.mxu0 0.0
        %389 = vmatpush1.xpose.msra.mxu0 0.0
        %390 = vmatprep.subr.mxu0 0.0
        %391 = vmatpush1.xpose.msra.mxu0 0.0
        %392 = vmatprep.subr.mxu0 0.0
        %393 = vmatpush1.xpose.msra.mxu0 0.0
        %394 = vmatprep.mubr.f32.mxu0 0.0
        %395 = vmatmul.mubr.f32.gmra.mrb[0].mxu0 %v326
        %v396 = vpop.f32.mrb[0].mxu0
        %v397 = vadd.f32 0.0, %v396
        %v398 = vpop.f32.mrb[0].mxu0
        %399 = vdwg.mxu0
        %400 = vrot.lane.b32.xlu0 %v308, 64
        %v401 = vpop.permute.xlu0 %400
        %v402 = vsel %vm325, %v308, 0
        %v404 = vsel %vm325, %v401, 0
        %406 = vmatprep.subr.mxu0 0.0
        %407 = vmatpush1.xpose.msra.mxu0 %v404
        %408 = vmatprep.subr.mxu0 0.0
        %409 = vmatpush1.xpose.msra.mxu0 0.0
        %410 = vmatprep.subr.mxu0 0.0
        %411 = vmatpush1.xpose.msra.mxu0 0.0
        %412 = vmatprep.subr.mxu0 0.0
        %413 = vmatpush1.xpose.msra.mxu0 0.0
        %414 = vmatprep.subr.mxu0 0.0
        %415 = vmatpush1.xpose.msra.mxu0 0.0
        %416 = vmatprep.subr.mxu0 0.0
        %417 = vmatpush1.xpose.msra.mxu0 0.0
        %418 = vmatprep.subr.mxu0 0.0
        %419 = vmatpush1.xpose.msra.mxu0 0.0
        %420 = vmatprep.subr.mxu0 0.0
        %421 = vmatpush1.xpose.msra.mxu0 0.0
        %422 = vmatprep.subr.mxu0 0.0
        %423 = vmatpush1.xpose.msra.mxu0 0.0
        %424 = vmatprep.subr.mxu0 0.0
        %425 = vmatpush1.xpose.msra.mxu0 0.0
        %426 = vmatprep.subr.mxu0 0.0
        %427 = vmatpush1.xpose.msra.mxu0 0.0
        %428 = vmatprep.subr.mxu0 0.0
        %429 = vmatpush1.xpose.msra.mxu0 0.0
        %430 = vmatprep.subr.mxu0 0.0
        %431 = vmatpush1.xpose.msra.mxu0 0.0
        %432 = vmatprep.subr.mxu0 0.0
        %433 = vmatpush1.xpose.msra.mxu0 0.0
        %434 = vmatprep.subr.mxu0 0.0
        %435 = vmatpush1.xpose.msra.mxu0 0.0
        %436 = vmatprep.subr.mxu0 0.0
        %437 = vmatpush1.xpose.msra.mxu0 0.0
        %438 = vmatprep.subr.mxu0 0.0
        %439 = vmatpush1.xpose.msra.mxu0 0.0
        %440 = vmatprep.subr.mxu0 0.0
        %441 = vmatpush1.xpose.msra.mxu0 0.0
        %442 = vmatprep.subr.mxu0 0.0
        %443 = vmatpush1.xpose.msra.mxu0 0.0
        %444 = vmatprep.subr.mxu0 0.0
        %445 = vmatpush1.xpose.msra.mxu0 0.0
        %446 = vmatprep.subr.mxu0 0.0
        %447 = vmatpush1.xpose.msra.mxu0 0.0
        %448 = vmatprep.subr.mxu0 0.0
        %449 = vmatpush1.xpose.msra.mxu0 0.0
        %450 = vmatprep.subr.mxu0 0.0
        %451 = vmatpush1.xpose.msra.mxu0 0.0
        %452 = vmatprep.subr.mxu0 0.0
        %453 = vmatpush1.xpose.msra.mxu0 0.0
        %454 = vmatprep.subr.mxu0 0.0
        %455 = vmatpush1.xpose.msra.mxu0 0.0
        %456 = vmatprep.subr.mxu0 0.0
        %457 = vmatpush1.xpose.msra.mxu0 0.0
        %458 = vmatprep.subr.mxu0 0.0
        %459 = vmatpush1.xpose.msra.mxu0 0.0
        %460 = vmatprep.subr.mxu0 0.0
        %461 = vmatpush1.xpose.msra.mxu0 0.0
        %462 = vmatprep.subr.mxu0 0.0
        %463 = vmatpush1.xpose.msra.mxu0 0.0
        %464 = vmatprep.subr.mxu0 0.0
        %465 = vmatpush1.xpose.msra.mxu0 0.0
        %466 = vmatprep.subr.mxu0 0.0
        %467 = vmatpush1.xpose.msra.mxu0 0.0
        %468 = vmatprep.subr.mxu0 0.0
        %469 = vmatpush1.xpose.msra.mxu0 0.0
        %470 = vmatprep.mubr.f32.mxu0 0.0
        %471 = vmatmul.mubr.f32.gmra.mrb[0].mxu0 %v402
        %v472 = vpop.f32.mrb[0].mxu0
        %v473 = vadd.f32 0.0, %v472
        %v474 = vpop.f32.mrb[0].mxu0
        %475 = vdwg.mxu0
        %476 = vrot.lane.b32.xlu0 %v310, 64
        %v477 = vpop.permute.xlu0 %476
        %v478 = vsel %vm325, %v310, 0
        %v480 = vsel %vm325, %v477, 0
        %482 = vmatprep.subr.mxu0 0.0
        %483 = vmatpush1.xpose.msra.mxu0 %v480
        %484 = vmatprep.subr.mxu0 0.0
        %485 = vmatpush1.xpose.msra.mxu0 0.0
        %486 = vmatprep.subr.mxu0 0.0
        %487 = vmatpush1.xpose.msra.mxu0 0.0
        %488 = vmatprep.subr.mxu0 0.0
        %489 = vmatpush1.xpose.msra.mxu0 0.0
        %490 = vmatprep.subr.mxu0 0.0
        %491 = vmatpush1.xpose.msra.mxu0 0.0
        %492 = vmatprep.subr.mxu0 0.0
        %493 = vmatpush1.xpose.msra.mxu0 0.0
        %494 = vmatprep.subr.mxu0 0.0
        %495 = vmatpush1.xpose.msra.mxu0 0.0
        %496 = vmatprep.subr.mxu0 0.0
        %497 = vmatpush1.xpose.msra.mxu0 0.0
        %498 = vmatprep.subr.mxu0 0.0
        %499 = vmatpush1.xpose.msra.mxu0 0.0
        %500 = vmatprep.subr.mxu0 0.0
        %501 = vmatpush1.xpose.msra.mxu0 0.0
        %502 = vmatprep.subr.mxu0 0.0
        %503 = vmatpush1.xpose.msra.mxu0 0.0
        %504 = vmatprep.subr.mxu0 0.0
        %505 = vmatpush1.xpose.msra.mxu0 0.0
        %506 = vmatprep.subr.mxu0 0.0
        %507 = vmatpush1.xpose.msra.mxu0 0.0
        %508 = vmatprep.subr.mxu0 0.0
        %509 = vmatpush1.xpose.msra.mxu0 0.0
        %510 = vmatprep.subr.mxu0 0.0
        %511 = vmatpush1.xpose.msra.mxu0 0.0
        %512 = vmatprep.subr.mxu0 0.0
        %513 = vmatpush1.xpose.msra.mxu0 0.0
        %514 = vmatprep.subr.mxu0 0.0
        %515 = vmatpush1.xpose.msra.mxu0 0.0
        %516 = vmatprep.subr.mxu0 0.0
        %517 = vmatpush1.xpose.msra.mxu0 0.0
        %518 = vmatprep.subr.mxu0 0.0
        %519 = vmatpush1.xpose.msra.mxu0 0.0
        %520 = vmatprep.subr.mxu0 0.0
        %521 = vmatpush1.xpose.msra.mxu0 0.0
        %522 = vmatprep.subr.mxu0 0.0
        %523 = vmatpush1.xpose.msra.mxu0 0.0
        %524 = vmatprep.subr.mxu0 0.0
        %525 = vmatpush1.xpose.msra.mxu0 0.0
        %526 = vmatprep.subr.mxu0 0.0
        %527 = vmatpush1.xpose.msra.mxu0 0.0
        %528 = vmatprep.subr.mxu0 0.0
        %529 = vmatpush1.xpose.msra.mxu0 0.0
        %530 = vmatprep.subr.mxu0 0.0
        %531 = vmatpush1.xpose.msra.mxu0 0.0
        %532 = vmatprep.subr.mxu0 0.0
        %533 = vmatpush1.xpose.msra.mxu0 0.0
        %534 = vmatprep.subr.mxu0 0.0
        %535 = vmatpush1.xpose.msra.mxu0 0.0
        %536 = vmatprep.subr.mxu0 0.0
        %537 = vmatpush1.xpose.msra.mxu0 0.0
        %538 = vmatprep.subr.mxu0 0.0
        %539 = vmatpush1.xpose.msra.mxu0 0.0
        %540 = vmatprep.subr.mxu0 0.0
        %541 = vmatpush1.xpose.msra.mxu0 0.0
        %542 = vmatprep.subr.mxu0 0.0
        %543 = vmatpush1.xpose.msra.mxu0 0.0
        %544 = vmatprep.subr.mxu0 0.0
        %545 = vmatpush1.xpose.msra.mxu0 0.0
        %546 = vmatprep.mubr.f32.mxu0 0.0
        %547 = vmatmul.mubr.f32.gmra.mrb[0].mxu0 %v478
        %v548 = vpop.f32.mrb[0].mxu0
        %v549 = vadd.f32 0.0, %v548
        %v550 = vpop.f32.mrb[0].mxu0
        %551 = vdwg.mxu0
        %552 = vrot.lane.b32.xlu0 %v312, 64
        %v553 = vpop.permute.xlu0 %552
        %v554 = vsel %vm325, %v312, 0
        %v556 = vsel %vm325, %v553, 0
        %558 = vmatprep.subr.mxu0 0.0
        %559 = vmatpush1.xpose.msra.mxu0 %v556
        %560 = vmatprep.subr.mxu0 0.0
        %561 = vmatpush1.xpose.msra.mxu0 0.0
        %562 = vmatprep.subr.mxu0 0.0
        %563 = vmatpush1.xpose.msra.mxu0 0.0
        %564 = vmatprep.subr.mxu0 0.0
        %565 = vmatpush1.xpose.msra.mxu0 0.0
        %566 = vmatprep.subr.mxu0 0.0
        %567 = vmatpush1.xpose.msra.mxu0 0.0
        %568 = vmatprep.subr.mxu0 0.0
        %569 = vmatpush1.xpose.msra.mxu0 0.0
        %570 = vmatprep.subr.mxu0 0.0
        %571 = vmatpush1.xpose.msra.mxu0 0.0
        %572 = vmatprep.subr.mxu0 0.0
        %573 = vmatpush1.xpose.msra.mxu0 0.0
        %574 = vmatprep.subr.mxu0 0.0
        %575 = vmatpush1.xpose.msra.mxu0 0.0
        %576 = vmatprep.subr.mxu0 0.0
        %577 = vmatpush1.xpose.msra.mxu0 0.0
        %578 = vmatprep.subr.mxu0 0.0
        %579 = vmatpush1.xpose.msra.mxu0 0.0
        %580 = vmatprep.subr.mxu0 0.0
        %581 = vmatpush1.xpose.msra.mxu0 0.0
        %582 = vmatprep.subr.mxu0 0.0
        %583 = vmatpush1.xpose.msra.mxu0 0.0
        %584 = vmatprep.subr.mxu0 0.0
        %585 = vmatpush1.xpose.msra.mxu0 0.0
        %586 = vmatprep.subr.mxu0 0.0
        %587 = vmatpush1.xpose.msra.mxu0 0.0
        %588 = vmatprep.subr.mxu0 0.0
        %589 = vmatpush1.xpose.msra.mxu0 0.0
        %590 = vmatprep.subr.mxu0 0.0
        %591 = vmatpush1.xpose.msra.mxu0 0.0
        %592 = vmatprep.subr.mxu0 0.0
        %593 = vmatpush1.xpose.msra.mxu0 0.0
        %594 = vmatprep.subr.mxu0 0.0
        %595 = vmatpush1.xpose.msra.mxu0 0.0
        %596 = vmatprep.subr.mxu0 0.0
        %597 = vmatpush1.xpose.msra.mxu0 0.0
        %598 = vmatprep.subr.mxu0 0.0
        %599 = vmatpush1.xpose.msra.mxu0 0.0
        %600 = vmatprep.subr.mxu0 0.0
        %601 = vmatpush1.xpose.msra.mxu0 0.0
        %602 = vmatprep.subr.mxu0 0.0
        %603 = vmatpush1.xpose.msra.mxu0 0.0
        %604 = vmatprep.subr.mxu0 0.0
        %605 = vmatpush1.xpose.msra.mxu0 0.0
        %606 = vmatprep.subr.mxu0 0.0
        %607 = vmatpush1.xpose.msra.mxu0 0.0
        %608 = vmatprep.subr.mxu0 0.0
        %609 = vmatpush1.xpose.msra.mxu0 0.0
        %610 = vmatprep.subr.mxu0 0.0
        %611 = vmatpush1.xpose.msra.mxu0 0.0
        %612 = vmatprep.subr.mxu0 0.0
        %613 = vmatpush1.xpose.msra.mxu0 0.0
        %614 = vmatprep.subr.mxu0 0.0
        %615 = vmatpush1.xpose.msra.mxu0 0.0
        %616 = vmatprep.subr.mxu0 0.0
        %617 = vmatpush1.xpose.msra.mxu0 0.0
        %618 = vmatprep.subr.mxu0 0.0
        %619 = vmatpush1.xpose.msra.mxu0 0.0
        %620 = vmatprep.subr.mxu0 0.0
        %621 = vmatpush1.xpose.msra.mxu0 0.0
        %622 = vmatprep.mubr.f32.mxu0 0.0
        %623 = vmatmul.mubr.f32.gmra.mrb[0].mxu0 %v554
        %v624 = vpop.f32.mrb[0].mxu0
        %v625 = vadd.f32 0.0, %v624
        %v626 = vpop.f32.mrb[0].mxu0
        %627 = vdwg.mxu0
        %v628 = vlaneseq
        %v629 = vshrl.u32 %v628, 7
        %v630 = vlaneseq
        %v631 = vand.u32 %v630, 127
        %vm632 = vcmp.eq.s32.totalorder %v629, %v631
        %v633 = vsel %vm632, -1e+30, 0.0
        %v634 = vstv %s221
        %v635 = vmul.f32 %v397, %v634
        %v636 = vmul.f32 %v473, %v634
        %v637 = vmul.f32 %v549, %v634
        %v638 = vmul.f32 %v625, %v634
        %v639 = vadd.f32 %v635, %v633
        %v640 = vadd.f32 %v636, %v633
        %v641 = vadd.f32 %v637, %v633
        %v642 = vadd.f32 %v638, %v633
        %vm643 = vcmask 64512
        %v644 = vsel %vm643, %v639, -inf
        %645 = vmax.xlane.f32.xlu0 %v644
        %v646 = vpop.xlane.xlu0 %645
        %v647 = vsel %vm643, %v640, -inf
        %648 = vmax.xlane.f32.xlu0 %v647
        %v649 = vpop.xlane.xlu0 %648
        %v650 = vsel %vm643, %v641, -inf
        %651 = vmax.xlane.f32.xlu0 %v650
        %v652 = vpop.xlane.xlu0 %651
        %v653 = vsel %vm643, %v642, -inf
        %654 = vmax.xlane.f32.xlu0 %v653
        %v655 = vpop.xlane.xlu0 %654
        %v656 = vsub.f32 %v639, %v646
        %v657 = vsub.f32 %v640, %v649
        %v658 = vsub.f32 %v641, %v652
        %v659 = vsub.f32 %v642, %v655
        %v660 = vmul.f32 %v656, 1.442695
        %v661 = vpow.pop %v660
        %v662 = vmul.f32 %v657, 1.442695
        %v663 = vpow.pop %v662
        %v664 = vmul.f32 %v658, 1.442695
        %v665 = vpow.pop %v664
        %v666 = vmul.f32 %v659, 1.442695
        %v667 = vpow.pop %v666
        %v668 = vsel %vm643, %v661, 0.0
        %669 = vadd.xlane.f32.xlu0 %v668
        %v670 = vpop.xlane.xlu0 %669
        %v671 = vsel %vm643, %v663, 0.0
        %672 = vadd.xlane.f32.xlu0 %v671
        %v673 = vpop.xlane.xlu0 %672
        %v674 = vsel %vm643, %v665, 0.0
        %675 = vadd.xlane.f32.xlu0 %v674
        %v676 = vpop.xlane.xlu0 %675
        %v677 = vsel %vm643, %v667, 0.0
        %678 = vadd.xlane.f32.xlu0 %v677
        %v679 = vpop.xlane.xlu0 %678
        %v681 = vsel %vm643, %v661, 0
        %683 = vmatprep.subr.mxu0 0.0
        %684 = vmatpush1.msra.mxu0 %v304
        %685 = vmatprep.subr.mxu0 0.0
        %686 = vmatpush1.msra.mxu0 0.0
        %687 = vmatprep.subr.mxu0 0.0
        %688 = vmatpush1.msra.mxu0 0.0
        %689 = vmatprep.subr.mxu0 0.0
        %690 = vmatpush1.msra.mxu0 0.0
        %691 = vmatprep.subr.mxu0 0.0
        %692 = vmatpush1.msra.mxu0 0.0
        %693 = vmatprep.subr.mxu0 0.0
        %694 = vmatpush1.msra.mxu0 0.0
        %695 = vmatprep.subr.mxu0 0.0
        %696 = vmatpush1.msra.mxu0 0.0
        %697 = vmatprep.subr.mxu0 0.0
        %698 = vmatpush1.msra.mxu0 0.0
        %699 = vmatprep.subr.mxu0 0.0
        %700 = vmatpush1.msra.mxu0 0.0
        %701 = vmatprep.subr.mxu0 0.0
        %702 = vmatpush1.msra.mxu0 0.0
        %703 = vmatprep.subr.mxu0 0.0
        %704 = vmatpush1.msra.mxu0 0.0
        %705 = vmatprep.subr.mxu0 0.0
        %706 = vmatpush1.msra.mxu0 0.0
        %707 = vmatprep.subr.mxu0 0.0
        %708 = vmatpush1.msra.mxu0 0.0
        %709 = vmatprep.subr.mxu0 0.0
        %710 = vmatpush1.msra.mxu0 0.0
        %711 = vmatprep.subr.mxu0 0.0
        %712 = vmatpush1.msra.mxu0 0.0
        %713 = vmatprep.subr.mxu0 0.0
        %714 = vmatpush1.msra.mxu0 0.0
        %715 = vmatprep.subr.mxu0 0.0
        %716 = vmatpush1.msra.mxu0 0.0
        %717 = vmatprep.subr.mxu0 0.0
        %718 = vmatpush1.msra.mxu0 0.0
        %719 = vmatprep.subr.mxu0 0.0
        %720 = vmatpush1.msra.mxu0 0.0
        %721 = vmatprep.subr.mxu0 0.0
        %722 = vmatpush1.msra.mxu0 0.0
        %723 = vmatprep.subr.mxu0 0.0
        %724 = vmatpush1.msra.mxu0 0.0
        %725 = vmatprep.subr.mxu0 0.0
        %726 = vmatpush1.msra.mxu0 0.0
        %727 = vmatprep.subr.mxu0 0.0
        %728 = vmatpush1.msra.mxu0 0.0
        %729 = vmatprep.subr.mxu0 0.0
        %730 = vmatpush1.msra.mxu0 0.0
        %731 = vmatprep.subr.mxu0 0.0
        %732 = vmatpush1.msra.mxu0 0.0
        %733 = vmatprep.subr.mxu0 0.0
        %734 = vmatpush1.msra.mxu0 0.0
        %735 = vmatprep.subr.mxu0 0.0
        %736 = vmatpush1.msra.mxu0 0.0
        %737 = vmatprep.subr.mxu0 0.0
        %738 = vmatpush1.msra.mxu0 0.0
        %739 = vmatprep.subr.mxu0 0.0
        %740 = vmatpush1.msra.mxu0 0.0
        %741 = vmatprep.subr.mxu0 0.0
        %742 = vmatpush1.msra.mxu0 0.0
        %743 = vmatprep.subr.mxu0 0.0
        %744 = vmatpush1.msra.mxu0 0.0
        %745 = vmatprep.subr.mxu0 0.0
        %746 = vmatpush1.msra.mxu0 0.0
        %747 = vmatprep.mubr.f32.mxu0 0.0
        %748 = vmatmul.mubr.f32.gmra.mrb[0].mxu0 %v681
        %v749 = vpop.f32.mrb[0].mxu0
        %v750 = vadd.f32 0.0, %v749
        %v751 = vpop.f32.mrb[0].mxu0
        %752 = vdwg.mxu0
        %v754 = vsel %vm643, %v663, 0
        %756 = vmatprep.subr.mxu0 0.0
        %757 = vmatpush1.msra.mxu0 %v315
        %758 = vmatprep.subr.mxu0 0.0
        %759 = vmatpush1.msra.mxu0 0.0
        %760 = vmatprep.subr.mxu0 0.0
        %761 = vmatpush1.msra.mxu0 0.0
        %762 = vmatprep.subr.mxu0 0.0
        %763 = vmatpush1.msra.mxu0 0.0
        %764 = vmatprep.subr.mxu0 0.0
        %765 = vmatpush1.msra.mxu0 0.0
        %766 = vmatprep.subr.mxu0 0.0
        %767 = vmatpush1.msra.mxu0 0.0
        %768 = vmatprep.subr.mxu0 0.0
        %769 = vmatpush1.msra.mxu0 0.0
        %770 = vmatprep.subr.mxu0 0.0
        %771 = vmatpush1.msra.mxu0 0.0
        %772 = vmatprep.subr.mxu0 0.0
        %773 = vmatpush1.msra.mxu0 0.0
        %774 = vmatprep.subr.mxu0 0.0
        %775 = vmatpush1.msra.mxu0 0.0
        %776 = vmatprep.subr.mxu0 0.0
        %777 = vmatpush1.msra.mxu0 0.0
        %778 = vmatprep.subr.mxu0 0.0
        %779 = vmatpush1.msra.mxu0 0.0
        %780 = vmatprep.subr.mxu0 0.0
        %781 = vmatpush1.msra.mxu0 0.0
        %782 = vmatprep.subr.mxu0 0.0
        %783 = vmatpush1.msra.mxu0 0.0
        %784 = vmatprep.subr.mxu0 0.0
        %785 = vmatpush1.msra.mxu0 0.0
        %786 = vmatprep.subr.mxu0 0.0
        %787 = vmatpush1.msra.mxu0 0.0
        %788 = vmatprep.subr.mxu0 0.0
        %789 = vmatpush1.msra.mxu0 0.0
        %790 = vmatprep.subr.mxu0 0.0
        %791 = vmatpush1.msra.mxu0 0.0
        %792 = vmatprep.subr.mxu0 0.0
        %793 = vmatpush1.msra.mxu0 0.0
        %794 = vmatprep.subr.mxu0 0.0
        %795 = vmatpush1.msra.mxu0 0.0
        %796 = vmatprep.subr.mxu0 0.0
        %797 = vmatpush1.msra.mxu0 0.0
        %798 = vmatprep.subr.mxu0 0.0
        %799 = vmatpush1.msra.mxu0 0.0
        %800 = vmatprep.subr.mxu0 0.0
        %801 = vmatpush1.msra.mxu0 0.0
        %802 = vmatprep.subr.mxu0 0.0
        %803 = vmatpush1.msra.mxu0 0.0
        %804 = vmatprep.subr.mxu0 0.0
        %805 = vmatpush1.msra.mxu0 0.0
        %806 = vmatprep.subr.mxu0 0.0
        %807 = vmatpush1.msra.mxu0 0.0
        %808 = vmatprep.subr.mxu0 0.0
        %809 = vmatpush1.msra.mxu0 0.0
        %810 = vmatprep.subr.mxu0 0.0
        %811 = vmatpush1.msra.mxu0 0.0
        %812 = vmatprep.subr.mxu0 0.0
        %813 = vmatpush1.msra.mxu0 0.0
        %814 = vmatprep.subr.mxu0 0.0
        %815 = vmatpush1.msra.mxu0 0.0
        %816 = vmatprep.subr.mxu0 0.0
        %817 = vmatpush1.msra.mxu0 0.0
        %818 = vmatprep.subr.mxu0 0.0
        %819 = vmatpush1.msra.mxu0 0.0
        %820 = vmatprep.mubr.f32.mxu0 0.0
        %821 = vmatmul.mubr.f32.gmra.mrb[0].mxu0 %v754
        %v822 = vpop.f32.mrb[0].mxu0
        %v823 = vadd.f32 0.0, %v822
        %v824 = vpop.f32.mrb[0].mxu0
        %825 = vdwg.mxu0
        %v827 = vsel %vm643, %v665, 0
        %829 = vmatprep.subr.mxu0 0.0
        %830 = vmatpush1.msra.mxu0 %v318
        %831 = vmatprep.subr.mxu0 0.0
        %832 = vmatpush1.msra.mxu0 0.0
        %833 = vmatprep.subr.mxu0 0.0
        %834 = vmatpush1.msra.mxu0 0.0
        %835 = vmatprep.subr.mxu0 0.0
        %836 = vmatpush1.msra.mxu0 0.0
        %837 = vmatprep.subr.mxu0 0.0
        %838 = vmatpush1.msra.mxu0 0.0
        %839 = vmatprep.subr.mxu0 0.0
        %840 = vmatpush1.msra.mxu0 0.0
        %841 = vmatprep.subr.mxu0 0.0
        %842 = vmatpush1.msra.mxu0 0.0
        %843 = vmatprep.subr.mxu0 0.0
        %844 = vmatpush1.msra.mxu0 0.0
        %845 = vmatprep.subr.mxu0 0.0
        %846 = vmatpush1.msra.mxu0 0.0
        %847 = vmatprep.subr.mxu0 0.0
        %848 = vmatpush1.msra.mxu0 0.0
        %849 = vmatprep.subr.mxu0 0.0
        %850 = vmatpush1.msra.mxu0 0.0
        %851 = vmatprep.subr.mxu0 0.0
        %852 = vmatpush1.msra.mxu0 0.0
        %853 = vmatprep.subr.mxu0 0.0
        %854 = vmatpush1.msra.mxu0 0.0
        %855 = vmatprep.subr.mxu0 0.0
        %856 = vmatpush1.msra.mxu0 0.0
        %857 = vmatprep.subr.mxu0 0.0
        %858 = vmatpush1.msra.mxu0 0.0
        %859 = vmatprep.subr.mxu0 0.0
        %860 = vmatpush1.msra.mxu0 0.0
        %861 = vmatprep.subr.mxu0 0.0
        %862 = vmatpush1.msra.mxu0 0.0
        %863 = vmatprep.subr.mxu0 0.0
        %864 = vmatpush1.msra.mxu0 0.0
        %865 = vmatprep.subr.mxu0 0.0
        %866 = vmatpush1.msra.mxu0 0.0
        %867 = vmatprep.subr.mxu0 0.0
        %868 = vmatpush1.msra.mxu0 0.0
        %869 = vmatprep.subr.mxu0 0.0
        %870 = vmatpush1.msra.mxu0 0.0
        %871 = vmatprep.subr.mxu0 0.0
        %872 = vmatpush1.msra.mxu0 0.0
        %873 = vmatprep.subr.mxu0 0.0
        %874 = vmatpush1.msra.mxu0 0.0
        %875 = vmatprep.subr.mxu0 0.0
        %876 = vmatpush1.msra.mxu0 0.0
        %877 = vmatprep.subr.mxu0 0.0
        %878 = vmatpush1.msra.mxu0 0.0
        %879 = vmatprep.subr.mxu0 0.0
        %880 = vmatpush1.msra.mxu0 0.0
        %881 = vmatprep.subr.mxu0 0.0
        %882 = vmatpush1.msra.mxu0 0.0
        %883 = vmatprep.subr.mxu0 0.0
        %884 = vmatpush1.msra.mxu0 0.0
        %885 = vmatprep.subr.mxu0 0.0
        %886 = vmatpush1.msra.mxu0 0.0
        %887 = vmatprep.subr.mxu0 0.0
        %888 = vmatpush1.msra.mxu0 0.0
        %889 = vmatprep.subr.mxu0 0.0
        %890 = vmatpush1.msra.mxu0 0.0
        %891 = vmatprep.subr.mxu0 0.0
        %892 = vmatpush1.msra.mxu0 0.0
        %893 = vmatprep.mubr.f32.mxu0 0.0
        %894 = vmatmul.mubr.f32.gmra.mrb[0].mxu0 %v827
        %v895 = vpop.f32.mrb[0].mxu0
        %v896 = vadd.f32 0.0, %v895
        %v897 = vpop.f32.mrb[0].mxu0
        %898 = vdwg.mxu0
        %v900 = vsel %vm643, %v667, 0
        %902 = vmatprep.subr.mxu0 0.0
        %903 = vmatpush1.msra.mxu0 %v321
        %904 = vmatprep.subr.mxu0 0.0
        %905 = vmatpush1.msra.mxu0 0.0
        %906 = vmatprep.subr.mxu0 0.0
        %907 = vmatpush1.msra.mxu0 0.0
        %908 = vmatprep.subr.mxu0 0.0
        %909 = vmatpush1.msra.mxu0 0.0
        %910 = vmatprep.subr.mxu0 0.0
        %911 = vmatpush1.msra.mxu0 0.0
        %912 = vmatprep.subr.mxu0 0.0
        %913 = vmatpush1.msra.mxu0 0.0
        %914 = vmatprep.subr.mxu0 0.0
        %915 = vmatpush1.msra.mxu0 0.0
        %916 = vmatprep.subr.mxu0 0.0
        %917 = vmatpush1.msra.mxu0 0.0
        %918 = vmatprep.subr.mxu0 0.0
        %919 = vmatpush1.msra.mxu0 0.0
        %920 = vmatprep.subr.mxu0 0.0
        %921 = vmatpush1.msra.mxu0 0.0
        %922 = vmatprep.subr.mxu0 0.0
        %923 = vmatpush1.msra.mxu0 0.0
        %924 = vmatprep.subr.mxu0 0.0
        %925 = vmatpush1.msra.mxu0 0.0
        %926 = vmatprep.subr.mxu0 0.0
        %927 = vmatpush1.msra.mxu0 0.0
        %928 = vmatprep.subr.mxu0 0.0
        %929 = vmatpush1.msra.mxu0 0.0
        %930 = vmatprep.subr.mxu0 0.0
        %931 = vmatpush1.msra.mxu0 0.0
        %932 = vmatprep.subr.mxu0 0.0
        %933 = vmatpush1.msra.mxu0 0.0
        %934 = vmatprep.subr.mxu0 0.0
        %935 = vmatpush1.msra.mxu0 0.0
        %936 = vmatprep.subr.mxu0 0.0
        %937 = vmatpush1.msra.mxu0 0.0
        %938 = vmatprep.subr.mxu0 0.0
        %939 = vmatpush1.msra.mxu0 0.0
        %940 = vmatprep.subr.mxu0 0.0
        %941 = vmatpush1.msra.mxu0 0.0
        %942 = vmatprep.subr.mxu0 0.0
        %943 = vmatpush1.msra.mxu0 0.0
        %944 = vmatprep.subr.mxu0 0.0
        %945 = vmatpush1.msra.mxu0 0.0
        %946 = vmatprep.subr.mxu0 0.0
        %947 = vmatpush1.msra.mxu0 0.0
        %948 = vmatprep.subr.mxu0 0.0
        %949 = vmatpush1.msra.mxu0 0.0
        %950 = vmatprep.subr.mxu0 0.0
        %951 = vmatpush1.msra.mxu0 0.0
        %952 = vmatprep.subr.mxu0 0.0
        %953 = vmatpush1.msra.mxu0 0.0
        %954 = vmatprep.subr.mxu0 0.0
        %955 = vmatpush1.msra.mxu0 0.0
        %956 = vmatprep.subr.mxu0 0.0
        %957 = vmatpush1.msra.mxu0 0.0
        %958 = vmatprep.subr.mxu0 0.0
        %959 = vmatpush1.msra.mxu0 0.0
        %960 = vmatprep.subr.mxu0 0.0
        %961 = vmatpush1.msra.mxu0 0.0
        %962 = vmatprep.subr.mxu0 0.0
        %963 = vmatpush1.msra.mxu0 0.0
        %964 = vmatprep.subr.mxu0 0.0
        %965 = vmatpush1.msra.mxu0 0.0
        %966 = vmatprep.mubr.f32.mxu0 0.0
        %967 = vmatmul.mubr.f32.gmra.mrb[0].mxu0 %v900
        %v968 = vpop.f32.mrb[0].mxu0
        %v969 = vadd.f32 0.0, %v968
        %v970 = vpop.f32.mrb[0].mxu0
        %971 = vdwg.mxu0
        %v972 = vrcp.pop %v670
        %v973 = vrcp.pop %v673
        %v974 = vrcp.pop %v676
        %v975 = vrcp.pop %v679
        %v976 = vmul.f32 %v750, %v972
        %v977 = vmul.f32 %v823, %v973
        %v978 = vmul.f32 %v896, %v974
        %v979 = vmul.f32 %v969, %v975
        %v980 = vld [vmem:[%s4] sm:$0x1]
        %v981 = vld [vmem:[%s3] sm:$0xff]
        %v982 = vld [vmem:[%s3 + $0x8] sm:$0xff]
        %v984 = vsel %vm325, %v976, 0
        %986 = vmatprep.subr.mxu0 0.0
        %987 = vmatpush1.msra.mxu0 %v981
        %988 = vmatprep.subr.mxu0 0.0
        %989 = vmatpush1.msra.mxu0 %v982
        %990 = vmatprep.subr.mxu0 0.0
        %991 = vmatpush1.msra.mxu0 0.0
        %992 = vmatprep.subr.mxu0 0.0
        %993 = vmatpush1.msra.mxu0 0.0
        %994 = vmatprep.subr.mxu0 0.0
        %995 = vmatpush1.msra.mxu0 0.0
        %996 = vmatprep.subr.mxu0 0.0
        %997 = vmatpush1.msra.mxu0 0.0
        %998 = vmatprep.subr.mxu0 0.0
        %999 = vmatpush1.msra.mxu0 0.0
        %1000 = vmatprep.subr.mxu0 0.0
        %1001 = vmatpush1.msra.mxu0 0.0
        %1002 = vmatprep.subr.mxu0 0.0
        %1003 = vmatpush1.msra.mxu0 0.0
        %1004 = vmatprep.subr.mxu0 0.0
        %1005 = vmatpush1.msra.mxu0 0.0
        %1006 = vmatprep.subr.mxu0 0.0
        %1007 = vmatpush1.msra.mxu0 0.0
        %1008 = vmatprep.subr.mxu0 0.0
        %1009 = vmatpush1.msra.mxu0 0.0
        %1010 = vmatprep.subr.mxu0 0.0
        %1011 = vmatpush1.msra.mxu0 0.0
        %1012 = vmatprep.subr.mxu0 0.0
        %1013 = vmatpush1.msra.mxu0 0.0
        %1014 = vmatprep.subr.mxu0 0.0
        %1015 = vmatpush1.msra.mxu0 0.0
        %1016 = vmatprep.subr.mxu0 0.0
        %1017 = vmatpush1.msra.mxu0 0.0
        %1018 = vmatprep.subr.mxu0 0.0
        %1019 = vmatpush1.msra.mxu0 0.0
        %1020 = vmatprep.subr.mxu0 0.0
        %1021 = vmatpush1.msra.mxu0 0.0
        %1022 = vmatprep.subr.mxu0 0.0
        %1023 = vmatpush1.msra.mxu0 0.0
        %1024 = vmatprep.subr.mxu0 0.0
        %1025 = vmatpush1.msra.mxu0 0.0
        %1026 = vmatprep.subr.mxu0 0.0
        %1027 = vmatpush1.msra.mxu0 0.0
        %1028 = vmatprep.subr.mxu0 0.0
        %1029 = vmatpush1.msra.mxu0 0.0
        %1030 = vmatprep.subr.mxu0 0.0
        %1031 = vmatpush1.msra.mxu0 0.0
        %1032 = vmatprep.subr.mxu0 0.0
        %1033 = vmatpush1.msra.mxu0 0.0
        %1034 = vmatprep.subr.mxu0 0.0
        %1035 = vmatpush1.msra.mxu0 0.0
        %1036 = vmatprep.subr.mxu0 0.0
        %1037 = vmatpush1.msra.mxu0 0.0
        %1038 = vmatprep.subr.mxu0 0.0
        %1039 = vmatpush1.msra.mxu0 0.0
        %1040 = vmatprep.subr.mxu0 0.0
        %1041 = vmatpush1.msra.mxu0 0.0
        %1042 = vmatprep.subr.mxu0 0.0
        %1043 = vmatpush1.msra.mxu0 0.0
        %1044 = vmatprep.subr.mxu0 0.0
        %1045 = vmatpush1.msra.mxu0 0.0
        %1046 = vmatprep.subr.mxu0 0.0
        %1047 = vmatpush1.msra.mxu0 0.0
        %1048 = vmatprep.subr.mxu0 0.0
        %1049 = vmatpush1.msra.mxu0 0.0
        %1050 = vmatprep.mubr.f32.mxu0 0.0
        %1051 = vmatmul.mubr.f32.gmra.mrb[0].mxu0 %v984
        %v1052 = vpop.f32.mrb[0].mxu0
        %v1053 = vadd.f32 0.0, %v1052
        %v1054 = vpop.f32.mrb[0].mxu0
        %1055 = vdwg.mxu0
        %v1057 = vlaneseq
        %v1058 = vshrl.u32 %v1057, 7
        %v1059 = vsub.s32 0, %v1058
        %v1060 = vrot.slane %v980, %v1059
        %v1062 = vadd.f32 %v1060, %v1053
        %v1063 = vld [vmem:[%s3 + $0x10] sm:$0xff]
        %v1064 = vld [vmem:[%s3 + $0x18] sm:$0xff]
        %v1066 = vsel %vm325, %v977, 0
        %1068 = vmatprep.subr.mxu0 0.0
        %1069 = vmatpush1.msra.mxu0 %v1063
        %1070 = vmatprep.subr.mxu0 0.0
        %1071 = vmatpush1.msra.mxu0 %v1064
        %1072 = vmatprep.subr.mxu0 0.0
        %1073 = vmatpush1.msra.mxu0 0.0
        %1074 = vmatprep.subr.mxu0 0.0
        %1075 = vmatpush1.msra.mxu0 0.0
        %1076 = vmatprep.subr.mxu0 0.0
        %1077 = vmatpush1.msra.mxu0 0.0
        %1078 = vmatprep.subr.mxu0 0.0
        %1079 = vmatpush1.msra.mxu0 0.0
        %1080 = vmatprep.subr.mxu0 0.0
        %1081 = vmatpush1.msra.mxu0 0.0
        %1082 = vmatprep.subr.mxu0 0.0
        %1083 = vmatpush1.msra.mxu0 0.0
        %1084 = vmatprep.subr.mxu0 0.0
        %1085 = vmatpush1.msra.mxu0 0.0
        %1086 = vmatprep.subr.mxu0 0.0
        %1087 = vmatpush1.msra.mxu0 0.0
        %1088 = vmatprep.subr.mxu0 0.0
        %1089 = vmatpush1.msra.mxu0 0.0
        %1090 = vmatprep.subr.mxu0 0.0
        %1091 = vmatpush1.msra.mxu0 0.0
        %1092 = vmatprep.subr.mxu0 0.0
        %1093 = vmatpush1.msra.mxu0 0.0
        %1094 = vmatprep.subr.mxu0 0.0
        %1095 = vmatpush1.msra.mxu0 0.0
        %1096 = vmatprep.subr.mxu0 0.0
        %1097 = vmatpush1.msra.mxu0 0.0
        %1098 = vmatprep.subr.mxu0 0.0
        %1099 = vmatpush1.msra.mxu0 0.0
        %1100 = vmatprep.subr.mxu0 0.0
        %1101 = vmatpush1.msra.mxu0 0.0
        %1102 = vmatprep.subr.mxu0 0.0
        %1103 = vmatpush1.msra.mxu0 0.0
        %1104 = vmatprep.subr.mxu0 0.0
        %1105 = vmatpush1.msra.mxu0 0.0
        %1106 = vmatprep.subr.mxu0 0.0
        %1107 = vmatpush1.msra.mxu0 0.0
        %1108 = vmatprep.subr.mxu0 0.0
        %1109 = vmatpush1.msra.mxu0 0.0
        %1110 = vmatprep.subr.mxu0 0.0
        %1111 = vmatpush1.msra.mxu0 0.0
        %1112 = vmatprep.subr.mxu0 0.0
        %1113 = vmatpush1.msra.mxu0 0.0
        %1114 = vmatprep.subr.mxu0 0.0
        %1115 = vmatpush1.msra.mxu0 0.0
        %1116 = vmatprep.subr.mxu0 0.0
        %1117 = vmatpush1.msra.mxu0 0.0
        %1118 = vmatprep.subr.mxu0 0.0
        %1119 = vmatpush1.msra.mxu0 0.0
        %1120 = vmatprep.subr.mxu0 0.0
        %1121 = vmatpush1.msra.mxu0 0.0
        %1122 = vmatprep.subr.mxu0 0.0
        %1123 = vmatpush1.msra.mxu0 0.0
        %1124 = vmatprep.subr.mxu0 0.0
        %1125 = vmatpush1.msra.mxu0 0.0
        %1126 = vmatprep.subr.mxu0 0.0
        %1127 = vmatpush1.msra.mxu0 0.0
        %1128 = vmatprep.subr.mxu0 0.0
        %1129 = vmatpush1.msra.mxu0 0.0
        %1130 = vmatprep.subr.mxu0 0.0
        %1131 = vmatpush1.msra.mxu0 0.0
        %1132 = vmatprep.mubr.f32.mxu0 0.0
        %1133 = vmatmul.mubr.f32.gmra.mrb[0].mxu0 %v1066
        %v1134 = vpop.f32.mrb[0].mxu0
        %v1135 = vadd.f32 0.0, %v1134
        %v1136 = vpop.f32.mrb[0].mxu0
        %1137 = vdwg.mxu0
        %v1138 = vadd.f32 %v1062, %v1135
        %v1139 = vld [vmem:[%s3 + $0x20] sm:$0xff]
        %v1140 = vld [vmem:[%s3 + $0x28] sm:$0xff]
        %v1142 = vsel %vm325, %v978, 0
        %1144 = vmatprep.subr.mxu0 0.0
        %1145 = vmatpush1.msra.mxu0 %v1139
        %1146 = vmatprep.subr.mxu0 0.0
        %1147 = vmatpush1.msra.mxu0 %v1140
        %1148 = vmatprep.subr.mxu0 0.0
        %1149 = vmatpush1.msra.mxu0 0.0
        %1150 = vmatprep.subr.mxu0 0.0
        %1151 = vmatpush1.msra.mxu0 0.0
        %1152 = vmatprep.subr.mxu0 0.0
        %1153 = vmatpush1.msra.mxu0 0.0
        %1154 = vmatprep.subr.mxu0 0.0
        %1155 = vmatpush1.msra.mxu0 0.0
        %1156 = vmatprep.subr.mxu0 0.0
        %1157 = vmatpush1.msra.mxu0 0.0
        %1158 = vmatprep.subr.mxu0 0.0
        %1159 = vmatpush1.msra.mxu0 0.0
        %1160 = vmatprep.subr.mxu0 0.0
        %1161 = vmatpush1.msra.mxu0 0.0
        %1162 = vmatprep.subr.mxu0 0.0
        %1163 = vmatpush1.msra.mxu0 0.0
        %1164 = vmatprep.subr.mxu0 0.0
        %1165 = vmatpush1.msra.mxu0 0.0
        %1166 = vmatprep.subr.mxu0 0.0
        %1167 = vmatpush1.msra.mxu0 0.0
        %1168 = vmatprep.subr.mxu0 0.0
        %1169 = vmatpush1.msra.mxu0 0.0
        %1170 = vmatprep.subr.mxu0 0.0
        %1171 = vmatpush1.msra.mxu0 0.0
        %1172 = vmatprep.subr.mxu0 0.0
        %1173 = vmatpush1.msra.mxu0 0.0
        %1174 = vmatprep.subr.mxu0 0.0
        %1175 = vmatpush1.msra.mxu0 0.0
        %1176 = vmatprep.subr.mxu0 0.0
        %1177 = vmatpush1.msra.mxu0 0.0
        %1178 = vmatprep.subr.mxu0 0.0
        %1179 = vmatpush1.msra.mxu0 0.0
        %1180 = vmatprep.subr.mxu0 0.0
        %1181 = vmatpush1.msra.mxu0 0.0
        %1182 = vmatprep.subr.mxu0 0.0
        %1183 = vmatpush1.msra.mxu0 0.0
        %1184 = vmatprep.subr.mxu0 0.0
        %1185 = vmatpush1.msra.mxu0 0.0
        %1186 = vmatprep.subr.mxu0 0.0
        %1187 = vmatpush1.msra.mxu0 0.0
        %1188 = vmatprep.subr.mxu0 0.0
        %1189 = vmatpush1.msra.mxu0 0.0
        %1190 = vmatprep.subr.mxu0 0.0
        %1191 = vmatpush1.msra.mxu0 0.0
        %1192 = vmatprep.subr.mxu0 0.0
        %1193 = vmatpush1.msra.mxu0 0.0
        %1194 = vmatprep.subr.mxu0 0.0
        %1195 = vmatpush1.msra.mxu0 0.0
        %1196 = vmatprep.subr.mxu0 0.0
        %1197 = vmatpush1.msra.mxu0 0.0
        %1198 = vmatprep.subr.mxu0 0.0
        %1199 = vmatpush1.msra.mxu0 0.0
        %1200 = vmatprep.subr.mxu0 0.0
        %1201 = vmatpush1.msra.mxu0 0.0
        %1202 = vmatprep.subr.mxu0 0.0
        %1203 = vmatpush1.msra.mxu0 0.0
        %1204 = vmatprep.subr.mxu0 0.0
        %1205 = vmatpush1.msra.mxu0 0.0
        %1206 = vmatprep.subr.mxu0 0.0
        %1207 = vmatpush1.msra.mxu0 0.0
        %1208 = vmatprep.mubr.f32.mxu0 0.0
        %1209 = vmatmul.mubr.f32.gmra.mrb[0].mxu0 %v1142
        %v1210 = vpop.f32.mrb[0].mxu0
        %v1211 = vadd.f32 0.0, %v1210
        %v1212 = vpop.f32.mrb[0].mxu0
        %1213 = vdwg.mxu0
        %v1214 = vadd.f32 %v1138, %v1211
        %v1215 = vld [vmem:[%s3 + $0x30] sm:$0xff]
        %v1216 = vld [vmem:[%s3 + $0x38] sm:$0xff]
        %v1218 = vsel %vm325, %v979, 0
        %1220 = vmatprep.subr.mxu0 0.0
        %1221 = vmatpush1.msra.mxu0 %v1215
        %1222 = vmatprep.subr.mxu0 0.0
        %1223 = vmatpush1.msra.mxu0 %v1216
        %1224 = vmatprep.subr.mxu0 0.0
        %1225 = vmatpush1.msra.mxu0 0.0
        %1226 = vmatprep.subr.mxu0 0.0
        %1227 = vmatpush1.msra.mxu0 0.0
        %1228 = vmatprep.subr.mxu0 0.0
        %1229 = vmatpush1.msra.mxu0 0.0
        %1230 = vmatprep.subr.mxu0 0.0
        %1231 = vmatpush1.msra.mxu0 0.0
        %1232 = vmatprep.subr.mxu0 0.0
        %1233 = vmatpush1.msra.mxu0 0.0
        %1234 = vmatprep.subr.mxu0 0.0
        %1235 = vmatpush1.msra.mxu0 0.0
        %1236 = vmatprep.subr.mxu0 0.0
        %1237 = vmatpush1.msra.mxu0 0.0
        %1238 = vmatprep.subr.mxu0 0.0
        %1239 = vmatpush1.msra.mxu0 0.0
        %1240 = vmatprep.subr.mxu0 0.0
        %1241 = vmatpush1.msra.mxu0 0.0
        %1242 = vmatprep.subr.mxu0 0.0
        %1243 = vmatpush1.msra.mxu0 0.0
        %1244 = vmatprep.subr.mxu0 0.0
        %1245 = vmatpush1.msra.mxu0 0.0
        %1246 = vmatprep.subr.mxu0 0.0
        %1247 = vmatpush1.msra.mxu0 0.0
        %1248 = vmatprep.subr.mxu0 0.0
        %1249 = vmatpush1.msra.mxu0 0.0
        %1250 = vmatprep.subr.mxu0 0.0
        %1251 = vmatpush1.msra.mxu0 0.0
        %1252 = vmatprep.subr.mxu0 0.0
        %1253 = vmatpush1.msra.mxu0 0.0
        %1254 = vmatprep.subr.mxu0 0.0
        %1255 = vmatpush1.msra.mxu0 0.0
        %1256 = vmatprep.subr.mxu0 0.0
        %1257 = vmatpush1.msra.mxu0 0.0
        %1258 = vmatprep.subr.mxu0 0.0
        %1259 = vmatpush1.msra.mxu0 0.0
        %1260 = vmatprep.subr.mxu0 0.0
        %1261 = vmatpush1.msra.mxu0 0.0
        %1262 = vmatprep.subr.mxu0 0.0
        %1263 = vmatpush1.msra.mxu0 0.0
        %1264 = vmatprep.subr.mxu0 0.0
        %1265 = vmatpush1.msra.mxu0 0.0
        %1266 = vmatprep.subr.mxu0 0.0
        %1267 = vmatpush1.msra.mxu0 0.0
        %1268 = vmatprep.subr.mxu0 0.0
        %1269 = vmatpush1.msra.mxu0 0.0
        %1270 = vmatprep.subr.mxu0 0.0
        %1271 = vmatpush1.msra.mxu0 0.0
        %1272 = vmatprep.subr.mxu0 0.0
        %1273 = vmatpush1.msra.mxu0 0.0
        %1274 = vmatprep.subr.mxu0 0.0
        %1275 = vmatpush1.msra.mxu0 0.0
        %1276 = vmatprep.subr.mxu0 0.0
        %1277 = vmatpush1.msra.mxu0 0.0
        %1278 = vmatprep.subr.mxu0 0.0
        %1279 = vmatpush1.msra.mxu0 0.0
        %1280 = vmatprep.subr.mxu0 0.0
        %1281 = vmatpush1.msra.mxu0 0.0
        %1282 = vmatprep.subr.mxu0 0.0
        %1283 = vmatpush1.msra.mxu0 0.0
        %1284 = vmatprep.mubr.f32.mxu0 0.0
        %1285 = vmatmul.mubr.f32.gmra.mrb[0].mxu0 %v1218
        %v1286 = vpop.f32.mrb[0].mxu0
        %v1287 = vadd.f32 0.0, %v1286
        %v1288 = vpop.f32.mrb[0].mxu0
        %1289 = vdwg.mxu0
        %v1290 = vadd.f32 %v1214, %v1287
        %1291 = vst.msk [vmem:[%s216] sm:$0xff] %vm231, %v1290
        %s1292 = sand.u32 %s138, 1
        %s1293 = scalar_lea.sflag [#allocation4], %s1292
        %s1294 = sand.u32 %s138, 1
        %s1295 = smul.addr %s1294, 8
        %s1296 = scalar_lea.vmem [#allocation3], %s1295
        // Predicated region
        $region41: #{tpu_custom_call.1} parent=39 // pred_check
          %p1297 = pneg %p148
        $region42: #{tpu_custom_call.1} parent=39 // pred_check_branch
          %1299 = sbr.rel (%p1297) target = $region44
        $region43: #{tpu_custom_call.1} parent=39 // pred_region
          %s1301 = ssub.s32 128, 128
          %1302 = vsyncadd %s1293, %s1301
          %s1303 = smul.addr %s20, 128
          %s1304 = scalar_lea.hbm %s5, %s1303
          %s1306 = sshll.u32 %s1296, 4
          %s1307 = int_to_ptr.vmem [resolvable:$true] %s1306
          %1309 = dma.vmem_to_hbm [thread:$0]  %s1307, 128, %s1304, %s1293
        $region44: #{tpu_custom_call.1} parent=39 // pred_fallthru
          _
      $region40: #{tpu_custom_call.1} parent=5 // pred_fallthru
        _
      %p1310 = scmp.le.s32.totalorder 2, %s15
      // Predicated region
      $region45: #{tpu_custom_call.1} parent=5 // pred_check
        %p1311 = pneg %p1310
      $region46: #{tpu_custom_call.1} parent=5 // pred_check_branch
        %1313 = sbr.rel (%p1311) target = $region48
      $region47: #{tpu_custom_call.1} parent=5 // pred_region
        %s1314 = ssub.s32 %s15, 2
        // Predicated region
        $region49: #{tpu_custom_call.1} parent=47 // pred_check
          %p1315 = pneg %p154
        $region50: #{tpu_custom_call.1} parent=47 // pred_check_branch
          %1317 = sbr.rel (%p1315) target = $region52
        $region51: #{tpu_custom_call.1} parent=47 // pred_region
          %s1318 = sand.u32 %s139, 1
          %s1319 = scalar_lea.sflag [#allocation4], %s1318
          %s1320 = sand.u32 %s139, 1
          %s1321 = smul.addr %s1320, 8
          %s1322 = scalar_lea.vmem [#allocation3], %s1321
          %1323 = dma.done %s1319, 128
        $region52: #{tpu_custom_call.1} parent=47 // pred_fallthru
          _
      $region48: #{tpu_custom_call.1} parent=5 // pred_fallthru
        _
    $region6: #{tpu_custom_call.1} parent=1 // loop_footer
      %s19 = sadd.s32 1, %s15
    $region7: #{tpu_custom_call.1} parent=1 // loop_footer_branch
      %14 = sbr.rel target = $region3
    $region8: #{tpu_custom_call.1} parent=1 // loop_exit
      _
    %1324 = vsyncpa [#allocation4], 1
    %s1325 = scalar_lea.sflag [#allocation4], 1
    %1326 = vsyncpa %s1325, 1

// kernel: tpu_custom_call.1
$region0: #{tpu_custom_call.1}
  #allocation0 [shape = 'u32[]', space=smem, size = 0x4, offset = 0x4, fixed_abs, tag = 'smem constant byte address 0x4 - core index']
  #allocation1 [shape = 'u32[144,128]{1,0:T(1,128)}', space=vmem, size = 0x12000, scoped, tag = 'internal scratch']
  #allocation2 [shape = 'f32[1]{0:T(128)S(6)}', space=smem, size = 0x200, scoped, tag = 'scoped memory for tpu_custom_call.1']
  %s0 = inlined_call_operand.<no memory space> [shape: f32[1], index: 0, kind: input, shape index: {}]
  %s1 = inlined_call_operand.vmem [shape: f32[2,8,32], index: 1, kind: input, shape index: {}]
  %s2 = inlined_call_operand.vmem [shape: f32[32,192], index: 2, kind: input, shape index: {}]
  %s3 = inlined_call_operand.vmem [shape: f32[64,32], index: 3, kind: input, shape index: {}]
  %s4 = inlined_call_operand.vmem [shape: f32[1,32], index: 4, kind: input, shape index: {}]
  %s5 = inlined_call_operand.hbm [shape: f32[2,8,32], index: 5, kind: output, shape index: {}]
  %s6 = sld [smem:[#allocation0]]
  $region53: #{tpu_custom_call.1} parent=0
    _
  %s8 = ssub.s32 1, %s6
  %s9 = scalar_select 0, %s8, %s6
  %10 = sst [smem:[#allocation2]] %s0
  $region1: #{tpu_custom_call.1} parent=0
    #allocation3 [shape = 'u8[8192]{0}', space=vmem, size = 0x2000, scoped, tag = 'output window, operand 0']
    #allocation4 [shape = 's32[2]{0}', space=sflag, size = 0x8, scoped, tag = 'scoped memory for tpu_custom_call.1']
    %11 = vsyncpa [#allocation4], 0
    %s12 = scalar_lea.sflag [#allocation4], 1
    %13 = vsyncpa %s12, 0
    loop: start=0, step=1, limit=4
    $region2: #{tpu_custom_call.1} parent=1 // loop_pre_header
      _
    $region3: #{tpu_custom_call.1} parent=1 // loop_header
      %s15 = sphi 0, %s19
      %p16 = scmp.ge.s32.totalorder %s15, 4
      %s23 = sphi 0, %s23
      %s25 = sphi 0, %s23
      %s26 = sphi 0, %s25
      %s40 = sphi 0, %s26
      %s46 = sphi 0, %s48
      %s49 = sphi 0, %s46
      %s50 = sphi 0, %s49
      %s66 = sphi 0, %s50
      %s70 = sphi 0, %s70
      %s72 = sphi 0, %s70
      %s73 = sphi 0, %s72
      %s87 = sphi 0, %s73
      %s91 = sphi 0, %s91
      %s93 = sphi 0, %s91
      %s94 = sphi 0, %s93
      %s108 = sphi 0, %s94
      %s112 = sphi 0, %s112
      %s114 = sphi 0, %s112
      %s115 = sphi 0, %s114
      %s129 = sphi 0, %s115
      %s135 = sphi 0, %s137
      %s138 = sphi 0, %s135
      %s139 = sphi 0, %s138
      %s155 = sphi 0, %s139
    $region4: #{tpu_custom_call.1} parent=1 // loop_header_branch
      %18 = sbr.rel (%p16) target = $region8
    $region5: #{tpu_custom_call.1} parent=1 // loop_body
      %s20 = ssub.s32 %s15, 1
      %s21 = ssub.s32 %s15, 2
      %s22 = sadd.s32 %s15, 1
      %s24 = sadd.s32 %s23, 1
      %p27 = scmp.eq.s32.totalorder %s15, 1
      %p28 = scmp.ne.s32.totalorder %s23, %s25
      %p29 = scmp.eq.s32.totalorder %s15, 0
      %p30 = por %p28, %p29
      %p31 = scmp.ne.s32.totalorder %s23, %s25
      %p32 = scmp.eq.s32.totalorder %s20, 1
      %p33 = por %p31, %p32
      %p34 = scmp.ne.s32.totalorder %s25, %s26
      %p35 = scmp.eq.s32.totalorder %s20, 0
      %p36 = por %p34, %p35
      %p37 = scmp.ne.s32.totalorder %s25, %s26
      %p38 = scmp.eq.s32.totalorder %s21, 1
      %p39 = por %p37, %p38
      %p41 = scmp.ne.s32.totalorder %s26, %s40
      %p42 = scmp.eq.s32.totalorder %s21, 0
      %p43 = por %p41, %p42
      %s44 = ssub.s32 %s15, %s22
      %p45 = scmp.eq.s32.totalorder %s44, 0
      %s47 = sadd.s32 %s46, 1
      %s48 = scalar_select %p45, %s46, %s47
      %p51 = pneg %p45
      %p52 = scmp.eq.s32.totalorder %s15, 1
      %p53 = por %p51, %p52
      %p54 = scmp.ne.s32.totalorder %s46, %s49
      %p55 = scmp.eq.s32.totalorder %s15, 0
      %p56 = por %p54, %p55
      %p57 = scmp.ne.s32.totalorder %s46, %s49
      %p58 = scmp.eq.s32.totalorder %s20, 1
      %p59 = por %p57, %p58
      %p60 = scmp.ne.s32.totalorder %s49, %s50
      %p61 = scmp.eq.s32.totalorder %s20, 0
      %p62 = por %p60, %p61
      %p63 = scmp.ne.s32.totalorder %s49, %s50
      %p64 = scmp.eq.s32.totalorder %s21, 1
      %p65 = por %p63, %p64
      %p67 = scmp.ne.s32.totalorder %s50, %s66
      %p68 = scmp.eq.s32.totalorder %s21, 0
      %p69 = por %p67, %p68
      %s71 = sadd.s32 %s70, 1
      %p74 = scmp.eq.s32.totalorder %s15, 1
      %p75 = scmp.ne.s32.totalorder %s70, %s72
      %p76 = scmp.eq.s32.totalorder %s15, 0
      %p77 = por %p75, %p76
      %p78 = scmp.ne.s32.totalorder %s70, %s72
      %p79 = scmp.eq.s32.totalorder %s20, 1
      %p80 = por %p78, %p79
      %p81 = scmp.ne.s32.totalorder %s72, %s73
      %p82 = scmp.eq.s32.totalorder %s20, 0
      %p83 = por %p81, %p82
      %p84 = scmp.ne.s32.totalorder %s72, %s73
      %p85 = scmp.eq.s32.totalorder %s21, 1
      %p86 = por %p84, %p85
      %p88 = scmp.ne.s32.totalorder %s73, %s87
      %p89 = scmp.eq.s32.totalorder %s21, 0
      %p90 = por %p88, %p89
      %s92 = sadd.s32 %s91, 1
      %p95 = scmp.eq.s32.totalorder %s15, 1
      %p96 = scmp.ne.s32.totalorder %s91, %s93
      %p97 = scmp.eq.s32.totalorder %s15, 0
      %p98 = por %p96, %p97
      %p99 = scmp.ne.s32.totalorder %s91, %s93
      %p100 = scmp.eq.s32.totalorder %s20, 1
      %p101 = por %p99, %p100
      %p102 = scmp.ne.s32.totalorder %s93, %s94
      %p103 = scmp.eq.s32.totalorder %s20, 0
      %p104 = por %p102, %p103
      %p105 = scmp.ne.s32.totalorder %s93, %s94
      %p106 = scmp.eq.s32.totalorder %s21, 1
      %p107 = por %p105, %p106
      %p109 = scmp.ne.s32.totalorder %s94, %s108
      %p110 = scmp.eq.s32.totalorder %s21, 0
      %p111 = por %p109, %p110
      %s113 = sadd.s32 %s112, 1
      %p116 = scmp.eq.s32.totalorder %s15, 1
      %p117 = scmp.ne.s32.totalorder %s112, %s114
      %p118 = scmp.eq.s32.totalorder %s15, 0
      %p119 = por %p117, %p118
      %p120 = scmp.ne.s32.totalorder %s112, %s114
      %p121 = scmp.eq.s32.totalorder %s20, 1
      %p122 = por %p120, %p121
      %p123 = scmp.ne.s32.totalorder %s114, %s115
      %p124 = scmp.eq.s32.totalorder %s20, 0
      %p125 = por %p123, %p124
      %p126 = scmp.ne.s32.totalorder %s114, %s115
      %p127 = scmp.eq.s32.totalorder %s21, 1
      %p128 = por %p126, %p127
      %p130 = scmp.ne.s32.totalorder %s115, %s129
      %p131 = scmp.eq.s32.totalorder %s21, 0
      %p132 = por %p130, %p131
      %s133 = ssub.s32 %s15, %s22
      %p134 = scmp.eq.s32.totalorder %s133, 0
      %s136 = sadd.s32 %s135, 1
      %s137 = scalar_select %p134, %s135, %s136
      %p140 = pneg %p134
      %p141 = scmp.eq.s32.totalorder %s15, 1
      %p142 = por %p140, %p141
      %p143 = scmp.ne.s32.totalorder %s135, %s138
      %p144 = scmp.eq.s32.totalorder %s15, 0
      %p145 = por %p143, %p144
      %p146 = scmp.ne.s32.totalorder %s135, %s138
      %p147 = scmp.eq.s32.totalorder %s20, 1
      %p148 = por %p146, %p147
      %p149 = scmp.ne.s32.totalorder %s138, %s139
      %p150 = scmp.eq.s32.totalorder %s20, 0
      %p151 = por %p149, %p150
      %p152 = scmp.ne.s32.totalorder %s138, %s139
      %p153 = scmp.eq.s32.totalorder %s21, 1
      %p154 = por %p152, %p153
      %p156 = scmp.ne.s32.totalorder %s139, %s155
      %p157 = scmp.eq.s32.totalorder %s21, 0
      %p158 = por %p156, %p157
      %p159 = scmp.le.s32.totalorder 1, %s15
      %p160 = scmp.lt.s32.totalorder %s15, 3
      %p161 = pnand %p159, %p160
      %p162 = pneg %p161
      // Predicated region
      $region9: #{tpu_custom_call.1} parent=5 // pred_check
        _
      $region10: #{tpu_custom_call.1} parent=5 // pred_check_branch
        %164 = sbr.rel (%p161) target = $region12
      $region11: #{tpu_custom_call.1} parent=5 // pred_region
        %s165 = ssub.s32 %s15, 1
        // Predicated region
        $region13: #{tpu_custom_call.1} parent=11 // pred_check
          %p166 = pneg %p36
        $region14: #{tpu_custom_call.1} parent=11 // pred_check_branch
          %168 = sbr.rel (%p166) target = $region16
        $region15: #{tpu_custom_call.1} parent=11 // pred_region
          _
        $region16: #{tpu_custom_call.1} parent=11 // pred_fallthru
          _
        // Predicated region
        $region17: #{tpu_custom_call.1} parent=11 // pred_check
          %p169 = pneg %p83
        $region18: #{tpu_custom_call.1} parent=11 // pred_check_branch
          %171 = sbr.rel (%p169) target = $region20
        $region19: #{tpu_custom_call.1} parent=11 // pred_region
          _
        $region20: #{tpu_custom_call.1} parent=11 // pred_fallthru
          _
        // Predicated region
        $region21: #{tpu_custom_call.1} parent=11 // pred_check
          %p172 = pneg %p104
        $region22: #{tpu_custom_call.1} parent=11 // pred_check_branch
          %174 = sbr.rel (%p172) target = $region24
        $region23: #{tpu_custom_call.1} parent=11 // pred_region
          _
        $region24: #{tpu_custom_call.1} parent=11 // pred_fallthru
          _
        // Predicated region
        $region25: #{tpu_custom_call.1} parent=11 // pred_check
          %p175 = pneg %p125
        $region26: #{tpu_custom_call.1} parent=11 // pred_check_branch
          %177 = sbr.rel (%p175) target = $region28
        $region27: #{tpu_custom_call.1} parent=11 // pred_region
          _
        $region28: #{tpu_custom_call.1} parent=11 // pred_fallthru
          _
      $region12: #{tpu_custom_call.1} parent=5 // pred_fallthru
        _
      %p178 = scmp.lt.s32.totalorder %s15, 2
      // Predicated region
      $region29: #{tpu_custom_call.1} parent=5 // pred_check
        %p179 = pneg %p178
      $region30: #{tpu_custom_call.1} parent=5 // pred_check_branch
        %181 = sbr.rel (%p179) target = $region32
      $region31: #{tpu_custom_call.1} parent=5 // pred_region
        // Predicated region
        $region33: #{tpu_custom_call.1} parent=31 // pred_check
          %p182 = pneg %p56
        $region34: #{tpu_custom_call.1} parent=31 // pred_check_branch
          %184 = sbr.rel (%p182) target = $region36
        $region35: #{tpu_custom_call.1} parent=31 // pred_region
          %p185 = scmp.lt.s32.totalorder %s15, 1
          %s186 = scalar_select %p185, %s15, 1
          %s187 = smul.addr %s186, 8
          %s188 = scalar_lea.vmem %s1, %s187
        $region36: #{tpu_custom_call.1} parent=31 // pred_fallthru
          _
      $region32: #{tpu_custom_call.1} parent=5 // pred_fallthru
        _
      %p189 = scmp.le.s32.totalorder 1, %s15
      %p190 = scmp.lt.s32.totalorder %s15, 3
      %p191 = pnand %p189, %p190
      %p192 = pneg %p191
      // Predicated region
      $region37: #{tpu_custom_call.1} parent=5 // pred_check
        _
      $region38: #{tpu_custom_call.1} parent=5 // pred_check_branch
        %194 = sbr.rel (%p191) target = $region40
      $region39: #{tpu_custom_call.1} parent=5 // pred_region
        %s195 = ssub.s32 %s15, 1
        %p196 = pneg %p36
        %p197 = pneg %p33
        %p198 = scmp.lt.s32.totalorder %s20, 1
        %s199 = scalar_select %p198, %s20, 1
        %s200 = smul.addr %s199, 8
        %s201 = scalar_lea.vmem %s1, %s200
        %p202 = pneg %p62
        %p203 = pneg %p59
        %p204 = pneg %p83
        %p205 = pneg %p80
        %p206 = pneg %p104
        %p207 = pneg %p101
        %p208 = pneg %p125
        %p209 = pneg %p122
        %p210 = pneg %p151
        %p211 = pneg %p148
        %s212 = sand.u32 %s138, 1
        %s213 = scalar_lea.sflag [#allocation4], %s212
        %s214 = sand.u32 %s138, 1
        %s215 = smul.addr %s214, 8
        %s216 = scalar_lea.vmem [#allocation3], %s215
        %p217 = scmp.lt.s32.totalorder %s20, 1
        %s218 = scalar_select %p217, %s20, 1
        %s219 = smul.addr %s218, 8
        %s220 = scalar_lea.vmem %s1, %s219
        %s221 = sld [smem:[#allocation2]]
        %v222 = vld [vmem:[%s220] sm:$0xff]
        %v223 = vld [vmem:[%s2] sm:$0xff]
        %v224 = vld [vmem:[%s2 + $0x8] sm:$0xff]
        %v225 = vld [vmem:[%s2 + $0x10] sm:$0xff]
        %v226 = vld [vmem:[%s2 + $0x18] sm:$0xff]
        %v227 = vld [vmem:[%s2 + $0x20] sm:$0xff]
        %v228 = vld [vmem:[%s2 + $0x28] sm:$0xff]
        %v229 = vld [vmem:[%s2 + $0x30] sm:$0xff]
        %v230 = vld [vmem:[%s2 + $0x38] sm:$0xff]
        %vm231 = vcmask 261120
        %v233 = vsel %vm231, %v222, 0
        %235 = vmatprep.subr.mxu0 %v224
        %236 = vmatpush1.msra.mxu0 %v223
        %237 = vmatprep.subr.mxu0 %v226
        %238 = vmatpush1.msra.mxu0 %v225
        %239 = vmatprep.subr.mxu0 %v228
        %240 = vmatpush1.msra.mxu0 %v227
        %241 = vmatprep.subr.mxu0 %v230
        %242 = vmatpush1.msra.mxu0 %v229
        %243 = vmatprep.subr.mxu0 0.0
        %244 = vmatpush1.msra.mxu0 0.0
        %245 = vmatprep.subr.mxu0 0.0
        %246 = vmatpush1.msra.mxu0 0.0
        %247 = vmatprep.subr.mxu0 0.0
        %248 = vmatpush1.msra.mxu0 0.0
        %249 = vmatprep.subr.mxu0 0.0
        %250 = vmatpush1.msra.mxu0 0.0
        %251 = vmatprep.subr.mxu0 0.0
        %252 = vmatpush1.msra.mxu0 0.0
        %253 = vmatprep.subr.mxu0 0.0
        %254 = vmatpush1.msra.mxu0 0.0
        %255 = vmatprep.subr.mxu0 0.0
        %256 = vmatpush1.msra.mxu0 0.0
        %257 = vmatprep.subr.mxu0 0.0
        %258 = vmatpush1.msra.mxu0 0.0
        %259 = vmatprep.subr.mxu0 0.0
        %260 = vmatpush1.msra.mxu0 0.0
        %261 = vmatprep.subr.mxu0 0.0
        %262 = vmatpush1.msra.mxu0 0.0
        %263 = vmatprep.subr.mxu0 0.0
        %264 = vmatpush1.msra.mxu0 0.0
        %265 = vmatprep.subr.mxu0 0.0
        %266 = vmatpush1.msra.mxu0 0.0
        %267 = vmatprep.subr.mxu0 0.0
        %268 = vmatpush1.msra.mxu0 0.0
        %269 = vmatprep.subr.mxu0 0.0
        %270 = vmatpush1.msra.mxu0 0.0
        %271 = vmatprep.subr.mxu0 0.0
        %272 = vmatpush1.msra.mxu0 0.0
        %273 = vmatprep.subr.mxu0 0.0
        %274 = vmatpush1.msra.mxu0 0.0
        %275 = vmatprep.subr.mxu0 0.0
        %276 = vmatpush1.msra.mxu0 0.0
        %277 = vmatprep.subr.mxu0 0.0
        %278 = vmatpush1.msra.mxu0 0.0
        %279 = vmatprep.subr.mxu0 0.0
        %280 = vmatpush1.msra.mxu0 0.0
        %281 = vmatprep.subr.mxu0 0.0
        %282 = vmatpush1.msra.mxu0 0.0
        %283 = vmatprep.subr.mxu0 0.0
        %284 = vmatpush1.msra.mxu0 0.0
        %285 = vmatprep.subr.mxu0 0.0
        %286 = vmatpush1.msra.mxu0 0.0
        %287 = vmatprep.subr.mxu0 0.0
        %288 = vmatpush1.msra.mxu0 0.0
        %289 = vmatprep.subr.mxu0 0.0
        %290 = vmatpush1.msra.mxu0 0.0
        %291 = vmatprep.subr.mxu0 0.0
        %292 = vmatpush1.msra.mxu0 0.0
        %293 = vmatprep.subr.mxu0 0.0
        %294 = vmatpush1.msra.mxu0 0.0
        %295 = vmatprep.subr.mxu0 0.0
        %296 = vmatpush1.msra.mxu0 0.0
        %297 = vmatprep.subr.mxu0 0.0
        %298 = vmatpush1.msra.mxu0 0.0
        %299 = vmatprep.mubr.f32.mxu0 0.0
        %300 = vmatmul.mubr.f32.gmra.mrb[0].mxu0 %v233
        %v301 = vpop.f32.mrb[0].mxu0
        %v302 = vadd.f32 0.0, %v301
        %v303 = vpop.f32.mrb[0].mxu0
        %v304 = vadd.f32 0.0, %v303
        %305 = vdwg.mxu0
        %307 = vrot.lane.b32.xlu0 %v302, 112
        %v308 = vpop.permute.xlu0 %307
        %309 = vrot.lane.b32.xlu0 %v302, 96
        %v310 = vpop.permute.xlu0 %309
        %311 = vrot.lane.b32.xlu0 %v302, 80
        %v312 = vpop.permute.xlu0 %311
        %314 = vrot.lane.b32.xlu0 %v304, 112
        %v315 = vpop.permute.xlu0 %314
        %317 = vrot.lane.b32.xlu0 %v304, 96
        %v318 = vpop.permute.xlu0 %317
        %320 = vrot.lane.b32.xlu0 %v304, 80
        %v321 = vpop.permute.xlu0 %320
        %323 = vrot.lane.b32.xlu0 %v302, 64
        %v324 = vpop.permute.xlu0 %323
        %vm325 = vcmask 130048
        %v326 = vsel %vm325, %v302, 0
        %v328 = vsel %vm325, %v324, 0
        %330 = vmatprep.subr.mxu0 0.0
        %331 = vmatpush1.xpose.msra.mxu0 %v328
        %332 = vmatprep.subr.mxu0 0.0
        %333 = vmatpush1.xpose.msra.mxu0 0.0
        %334 = vmatprep.subr.mxu0 0.0
        %335 = vmatpush1.xpose.msra.mxu0 0.0
        %336 = vmatprep.subr.mxu0 0.0
        %337 = vmatpush1.xpose.msra.mxu0 0.0
        %338 = vmatprep.subr.mxu0 0.0
        %339 = vmatpush1.xpose.msra.mxu0 0.0
        %340 = vmatprep.subr.mxu0 0.0
        %341 = vmatpush1.xpose.msra.mxu0 0.0
        %342 = vmatprep.subr.mxu0 0.0
        %343 = vmatpush1.xpose.msra.mxu0 0.0
        %344 = vmatprep.subr.mxu0 0.0
        %345 = vmatpush1.xpose.msra.mxu0 0.0
        %346 = vmatprep.subr.mxu0 0.0
        %347 = vmatpush1.xpose.msra.mxu0 0.0
        %348 = vmatprep.subr.mxu0 0.0
        %349 = vmatpush1.xpose.msra.mxu0 0.0
        %350 = vmatprep.subr.mxu0 0.0
        %351 = vmatpush1.xpose.msra.mxu0 0.0
        %352 = vmatprep.subr.mxu0 0.0
        %353 = vmatpush1.xpose.msra.mxu0 0.0
        %354 = vmatprep.subr.mxu0 0.0
        %355 = vmatpush1.xpose.msra.mxu0 0.0
        %356 = vmatprep.subr.mxu0 0.0
        %357 = vmatpush1.xpose.msra.mxu0 0.0
        %358 = vmatprep.subr.mxu0 0.0
        %359 = vmatpush1.xpose.msra.mxu0 0.0
        %360 = vmatprep.subr.mxu0 0.0
        %361 = vmatpush1.xpose.msra.mxu0 0.0
        %362 = vmatprep.subr.mxu0 0.0
        %363 = vmatpush1.xpose.msra.mxu0 0.0
        %364 = vmatprep.subr.mxu0 0.0
        %365 = vmatpush1.xpose.msra.mxu0 0.0
        %366 = vmatprep.subr.mxu0 0.0
        %367 = vmatpush1.xpose.msra.mxu0 0.0
        %368 = vmatprep.subr.mxu0 0.0
        %369 = vmatpush1.xpose.msra.mxu0 0.0
        %370 = vmatprep.subr.mxu0 0.0
        %371 = vmatpush1.xpose.msra.mxu0 0.0
        %372 = vmatprep.subr.mxu0 0.0
        %373 = vmatpush1.xpose.msra.mxu0 0.0
        %374 = vmatprep.subr.mxu0 0.0
        %375 = vmatpush1.xpose.msra.mxu0 0.0
        %376 = vmatprep.subr.mxu0 0.0
        %377 = vmatpush1.xpose.msra.mxu0 0.0
        %378 = vmatprep.subr.mxu0 0.0
        %379 = vmatpush1.xpose.msra.mxu0 0.0
        %380 = vmatprep.subr.mxu0 0.0
        %381 = vmatpush1.xpose.msra.mxu0 0.0
        %382 = vmatprep.subr.mxu0 0.0
        %383 = vmatpush1.xpose.msra.mxu0 0.0
        %384 = vmatprep.subr.mxu0 0.0
        %385 = vmatpush1.xpose.msra.mxu0 0.0
        %386 = vmatprep.subr.mxu0 0.0
        %387 = vmatpush1.xpose.msra.mxu0 0.0
        %388 = vmatprep.subr.mxu0 0.0
        %389 = vmatpush1.xpose.msra.mxu0 0.0
        %390 = vmatprep.subr.mxu0 0.0
        %391 = vmatpush1.xpose.msra.mxu0 0.0
        %392 = vmatprep.subr.mxu0 0.0
        %393 = vmatpush1.xpose.msra.mxu0 0.0
        %394 = vmatprep.mubr.f32.mxu0 0.0
        %395 = vmatmul.mubr.f32.gmra.mrb[0].mxu0 %v326
        %v396 = vpop.f32.mrb[0].mxu0
        %v397 = vadd.f32 0.0, %v396
        %v398 = vpop.f32.mrb[0].mxu0
        %399 = vdwg.mxu0
        %400 = vrot.lane.b32.xlu0 %v308, 64
        %v401 = vpop.permute.xlu0 %400
        %v402 = vsel %vm325, %v308, 0
        %v404 = vsel %vm325, %v401, 0
        %406 = vmatprep.subr.mxu0 0.0
        %407 = vmatpush1.xpose.msra.mxu0 %v404
        %408 = vmatprep.subr.mxu0 0.0
        %409 = vmatpush1.xpose.msra.mxu0 0.0
        %410 = vmatprep.subr.mxu0 0.0
        %411 = vmatpush1.xpose.msra.mxu0 0.0
        %412 = vmatprep.subr.mxu0 0.0
        %413 = vmatpush1.xpose.msra.mxu0 0.0
        %414 = vmatprep.subr.mxu0 0.0
        %415 = vmatpush1.xpose.msra.mxu0 0.0
        %416 = vmatprep.subr.mxu0 0.0
        %417 = vmatpush1.xpose.msra.mxu0 0.0
        %418 = vmatprep.subr.mxu0 0.0
        %419 = vmatpush1.xpose.msra.mxu0 0.0
        %420 = vmatprep.subr.mxu0 0.0
        %421 = vmatpush1.xpose.msra.mxu0 0.0
        %422 = vmatprep.subr.mxu0 0.0
        %423 = vmatpush1.xpose.msra.mxu0 0.0
        %424 = vmatprep.subr.mxu0 0.0
        %425 = vmatpush1.xpose.msra.mxu0 0.0
        %426 = vmatprep.subr.mxu0 0.0
        %427 = vmatpush1.xpose.msra.mxu0 0.0
        %428 = vmatprep.subr.mxu0 0.0
        %429 = vmatpush1.xpose.msra.mxu0 0.0
        %430 = vmatprep.subr.mxu0 0.0
        %431 = vmatpush1.xpose.msra.mxu0 0.0
        %432 = vmatprep.subr.mxu0 0.0
        %433 = vmatpush1.xpose.msra.mxu0 0.0
        %434 = vmatprep.subr.mxu0 0.0
        %435 = vmatpush1.xpose.msra.mxu0 0.0
        %436 = vmatprep.subr.mxu0 0.0
        %437 = vmatpush1.xpose.msra.mxu0 0.0
        %438 = vmatprep.subr.mxu0 0.0
        %439 = vmatpush1.xpose.msra.mxu0 0.0
        %440 = vmatprep.subr.mxu0 0.0
        %441 = vmatpush1.xpose.msra.mxu0 0.0
        %442 = vmatprep.subr.mxu0 0.0
        %443 = vmatpush1.xpose.msra.mxu0 0.0
        %444 = vmatprep.subr.mxu0 0.0
        %445 = vmatpush1.xpose.msra.mxu0 0.0
        %446 = vmatprep.subr.mxu0 0.0
        %447 = vmatpush1.xpose.msra.mxu0 0.0
        %448 = vmatprep.subr.mxu0 0.0
        %449 = vmatpush1.xpose.msra.mxu0 0.0
        %450 = vmatprep.subr.mxu0 0.0
        %451 = vmatpush1.xpose.msra.mxu0 0.0
        %452 = vmatprep.subr.mxu0 0.0
        %453 = vmatpush1.xpose.msra.mxu0 0.0
        %454 = vmatprep.subr.mxu0 0.0
        %455 = vmatpush1.xpose.msra.mxu0 0.0
        %456 = vmatprep.subr.mxu0 0.0
        %457 = vmatpush1.xpose.msra.mxu0 0.0
        %458 = vmatprep.subr.mxu0 0.0
        %459 = vmatpush1.xpose.msra.mxu0 0.0
        %460 = vmatprep.subr.mxu0 0.0
        %461 = vmatpush1.xpose.msra.mxu0 0.0
        %462 = vmatprep.subr.mxu0 0.0
        %463 = vmatpush1.xpose.msra.mxu0 0.0
        %464 = vmatprep.subr.mxu0 0.0
        %465 = vmatpush1.xpose.msra.mxu0 0.0
        %466 = vmatprep.subr.mxu0 0.0
        %467 = vmatpush1.xpose.msra.mxu0 0.0
        %468 = vmatprep.subr.mxu0 0.0
        %469 = vmatpush1.xpose.msra.mxu0 0.0
        %470 = vmatprep.mubr.f32.mxu0 0.0
        %471 = vmatmul.mubr.f32.gmra.mrb[0].mxu0 %v402
        %v472 = vpop.f32.mrb[0].mxu0
        %v473 = vadd.f32 0.0, %v472
        %v474 = vpop.f32.mrb[0].mxu0
        %475 = vdwg.mxu0
        %476 = vrot.lane.b32.xlu0 %v310, 64
        %v477 = vpop.permute.xlu0 %476
        %v478 = vsel %vm325, %v310, 0
        %v480 = vsel %vm325, %v477, 0
        %482 = vmatprep.subr.mxu0 0.0
        %483 = vmatpush1.xpose.msra.mxu0 %v480
        %484 = vmatprep.subr.mxu0 0.0
        %485 = vmatpush1.xpose.msra.mxu0 0.0
        %486 = vmatprep.subr.mxu0 0.0
        %487 = vmatpush1.xpose.msra.mxu0 0.0
        %488 = vmatprep.subr.mxu0 0.0
        %489 = vmatpush1.xpose.msra.mxu0 0.0
        %490 = vmatprep.subr.mxu0 0.0
        %491 = vmatpush1.xpose.msra.mxu0 0.0
        %492 = vmatprep.subr.mxu0 0.0
        %493 = vmatpush1.xpose.msra.mxu0 0.0
        %494 = vmatprep.subr.mxu0 0.0
        %495 = vmatpush1.xpose.msra.mxu0 0.0
        %496 = vmatprep.subr.mxu0 0.0
        %497 = vmatpush1.xpose.msra.mxu0 0.0
        %498 = vmatprep.subr.mxu0 0.0
        %499 = vmatpush1.xpose.msra.mxu0 0.0
        %500 = vmatprep.subr.mxu0 0.0
        %501 = vmatpush1.xpose.msra.mxu0 0.0
        %502 = vmatprep.subr.mxu0 0.0
        %503 = vmatpush1.xpose.msra.mxu0 0.0
        %504 = vmatprep.subr.mxu0 0.0
        %505 = vmatpush1.xpose.msra.mxu0 0.0
        %506 = vmatprep.subr.mxu0 0.0
        %507 = vmatpush1.xpose.msra.mxu0 0.0
        %508 = vmatprep.subr.mxu0 0.0
        %509 = vmatpush1.xpose.msra.mxu0 0.0
        %510 = vmatprep.subr.mxu0 0.0
        %511 = vmatpush1.xpose.msra.mxu0 0.0
        %512 = vmatprep.subr.mxu0 0.0
        %513 = vmatpush1.xpose.msra.mxu0 0.0
        %514 = vmatprep.subr.mxu0 0.0
        %515 = vmatpush1.xpose.msra.mxu0 0.0
        %516 = vmatprep.subr.mxu0 0.0
        %517 = vmatpush1.xpose.msra.mxu0 0.0
        %518 = vmatprep.subr.mxu0 0.0
        %519 = vmatpush1.xpose.msra.mxu0 0.0
        %520 = vmatprep.subr.mxu0 0.0
        %521 = vmatpush1.xpose.msra.mxu0 0.0
        %522 = vmatprep.subr.mxu0 0.0
        %523 = vmatpush1.xpose.msra.mxu0 0.0
        %524 = vmatprep.subr.mxu0 0.0
        %525 = vmatpush1.xpose.msra.mxu0 0.0
        %526 = vmatprep.subr.mxu0 0.0
        %527 = vmatpush1.xpose.msra.mxu0 0.0
        %528 = vmatprep.subr.mxu0 0.0
        %529 = vmatpush1.xpose.msra.mxu0 0.0
        %530 = vmatprep.subr.mxu0 0.0
        %531 = vmatpush1.xpose.msra.mxu0 0.0
        %532 = vmatprep.subr.mxu0 0.0
        %533 = vmatpush1.xpose.msra.mxu0 0.0
        %534 = vmatprep.subr.mxu0 0.0
        %535 = vmatpush1.xpose.msra.mxu0 0.0
        %536 = vmatprep.subr.mxu0 0.0
        %537 = vmatpush1.xpose.msra.mxu0 0.0
        %538 = vmatprep.subr.mxu0 0.0
        %539 = vmatpush1.xpose.msra.mxu0 0.0
        %540 = vmatprep.subr.mxu0 0.0
        %541 = vmatpush1.xpose.msra.mxu0 0.0
        %542 = vmatprep.subr.mxu0 0.0
        %543 = vmatpush1.xpose.msra.mxu0 0.0
        %544 = vmatprep.subr.mxu0 0.0
        %545 = vmatpush1.xpose.msra.mxu0 0.0
        %546 = vmatprep.mubr.f32.mxu0 0.0
        %547 = vmatmul.mubr.f32.gmra.mrb[0].mxu0 %v478
        %v548 = vpop.f32.mrb[0].mxu0
        %v549 = vadd.f32 0.0, %v548
        %v550 = vpop.f32.mrb[0].mxu0
        %551 = vdwg.mxu0
        %552 = vrot.lane.b32.xlu0 %v312, 64
        %v553 = vpop.permute.xlu0 %552
        %v554 = vsel %vm325, %v312, 0
        %v556 = vsel %vm325, %v553, 0
        %558 = vmatprep.subr.mxu0 0.0
        %559 = vmatpush1.xpose.msra.mxu0 %v556
        %560 = vmatprep.subr.mxu0 0.0
        %561 = vmatpush1.xpose.msra.mxu0 0.0
        %562 = vmatprep.subr.mxu0 0.0
        %563 = vmatpush1.xpose.msra.mxu0 0.0
        %564 = vmatprep.subr.mxu0 0.0
        %565 = vmatpush1.xpose.msra.mxu0 0.0
        %566 = vmatprep.subr.mxu0 0.0
        %567 = vmatpush1.xpose.msra.mxu0 0.0
        %568 = vmatprep.subr.mxu0 0.0
        %569 = vmatpush1.xpose.msra.mxu0 0.0
        %570 = vmatprep.subr.mxu0 0.0
        %571 = vmatpush1.xpose.msra.mxu0 0.0
        %572 = vmatprep.subr.mxu0 0.0
        %573 = vmatpush1.xpose.msra.mxu0 0.0
        %574 = vmatprep.subr.mxu0 0.0
        %575 = vmatpush1.xpose.msra.mxu0 0.0
        %576 = vmatprep.subr.mxu0 0.0
        %577 = vmatpush1.xpose.msra.mxu0 0.0
        %578 = vmatprep.subr.mxu0 0.0
        %579 = vmatpush1.xpose.msra.mxu0 0.0
        %580 = vmatprep.subr.mxu0 0.0
        %581 = vmatpush1.xpose.msra.mxu0 0.0
        %582 = vmatprep.subr.mxu0 0.0
        %583 = vmatpush1.xpose.msra.mxu0 0.0
        %584 = vmatprep.subr.mxu0 0.0
        %585 = vmatpush1.xpose.msra.mxu0 0.0
        %586 = vmatprep.subr.mxu0 0.0
        %587 = vmatpush1.xpose.msra.mxu0 0.0
        %588 = vmatprep.subr.mxu0 0.0
        %589 = vmatpush1.xpose.msra.mxu0 0.0
        %590 = vmatprep.subr.mxu0 0.0
        %591 = vmatpush1.xpose.msra.mxu0 0.0
        %592 = vmatprep.subr.mxu0 0.0
        %593 = vmatpush1.xpose.msra.mxu0 0.0
        %594 = vmatprep.subr.mxu0 0.0
        %595 = vmatpush1.xpose.msra.mxu0 0.0
        %596 = vmatprep.subr.mxu0 0.0
        %597 = vmatpush1.xpose.msra.mxu0 0.0
        %598 = vmatprep.subr.mxu0 0.0
        %599 = vmatpush1.xpose.msra.mxu0 0.0
        %600 = vmatprep.subr.mxu0 0.0
        %601 = vmatpush1.xpose.msra.mxu0 0.0
        %602 = vmatprep.subr.mxu0 0.0
        %603 = vmatpush1.xpose.msra.mxu0 0.0
        %604 = vmatprep.subr.mxu0 0.0
        %605 = vmatpush1.xpose.msra.mxu0 0.0
        %606 = vmatprep.subr.mxu0 0.0
        %607 = vmatpush1.xpose.msra.mxu0 0.0
        %608 = vmatprep.subr.mxu0 0.0
        %609 = vmatpush1.xpose.msra.mxu0 0.0
        %610 = vmatprep.subr.mxu0 0.0
        %611 = vmatpush1.xpose.msra.mxu0 0.0
        %612 = vmatprep.subr.mxu0 0.0
        %613 = vmatpush1.xpose.msra.mxu0 0.0
        %614 = vmatprep.subr.mxu0 0.0
        %615 = vmatpush1.xpose.msra.mxu0 0.0
        %616 = vmatprep.subr.mxu0 0.0
        %617 = vmatpush1.xpose.msra.mxu0 0.0
        %618 = vmatprep.subr.mxu0 0.0
        %619 = vmatpush1.xpose.msra.mxu0 0.0
        %620 = vmatprep.subr.mxu0 0.0
        %621 = vmatpush1.xpose.msra.mxu0 0.0
        %622 = vmatprep.mubr.f32.mxu0 0.0
        %623 = vmatmul.mubr.f32.gmra.mrb[0].mxu0 %v554
        %v624 = vpop.f32.mrb[0].mxu0
        %v625 = vadd.f32 0.0, %v624
        %v626 = vpop.f32.mrb[0].mxu0
        %627 = vdwg.mxu0
        %v628 = vlaneseq
        %v629 = vshrl.u32 %v628, 7
        %v630 = vlaneseq
        %v631 = vand.u32 %v630, 127
        %vm632 = vcmp.eq.s32.totalorder %v629, %v631
        %v633 = vsel %vm632, -1e+30, 0.0
        %v634 = vstv %s221
        %v635 = vmul.f32 %v397, %v634
        %v636 = vmul.f32 %v473, %v634
        %v637 = vmul.f32 %v549, %v634
        %v638 = vmul.f32 %v625, %v634
        %v639 = vadd.f32 %v635, %v633
        %v640 = vadd.f32 %v636, %v633
        %v641 = vadd.f32 %v637, %v633
        %v642 = vadd.f32 %v638, %v633
        %vm643 = vcmask 64512
        %v644 = vsel %vm643, %v639, -inf
        %645 = vmax.xlane.f32.xlu0 %v644
        %v646 = vpop.xlane.xlu0 %645
        %v647 = vsel %vm643, %v640, -inf
        %648 = vmax.xlane.f32.xlu0 %v647
        %v649 = vpop.xlane.xlu0 %648
        %v650 = vsel %vm643, %v641, -inf
        %651 = vmax.xlane.f32.xlu0 %v650
        %v652 = vpop.xlane.xlu0 %651
        %v653 = vsel %vm643, %v642, -inf
        %654 = vmax.xlane.f32.xlu0 %v653
        %v655 = vpop.xlane.xlu0 %654
        %v656 = vsub.f32 %v639, %v646
        %v657 = vsub.f32 %v640, %v649
        %v658 = vsub.f32 %v641, %v652
        %v659 = vsub.f32 %v642, %v655
        %v660 = vmul.f32 %v656, 1.442695
        %v661 = vpow.pop %v660
        %v662 = vmul.f32 %v657, 1.442695
        %v663 = vpow.pop %v662
        %v664 = vmul.f32 %v658, 1.442695
        %v665 = vpow.pop %v664
        %v666 = vmul.f32 %v659, 1.442695
        %v667 = vpow.pop %v666
        %v668 = vsel %vm643, %v661, 0.0
        %669 = vadd.xlane.f32.xlu0 %v668
        %v670 = vpop.xlane.xlu0 %669
        %v671 = vsel %vm643, %v663, 0.0
        %672 = vadd.xlane.f32.xlu0 %v671
        %v673 = vpop.xlane.xlu0 %672
        %v674 = vsel %vm643, %v665, 0.0
        %675 = vadd.xlane.f32.xlu0 %v674
        %v676 = vpop.xlane.xlu0 %675
        %v677 = vsel %vm643, %v667, 0.0
        %678 = vadd.xlane.f32.xlu0 %v677
        %v679 = vpop.xlane.xlu0 %678
        %v681 = vsel %vm643, %v661, 0
        %683 = vmatprep.subr.mxu0 0.0
        %684 = vmatpush1.msra.mxu0 %v304
        %685 = vmatprep.subr.mxu0 0.0
        %686 = vmatpush1.msra.mxu0 0.0
        %687 = vmatprep.subr.mxu0 0.0
        %688 = vmatpush1.msra.mxu0 0.0
        %689 = vmatprep.subr.mxu0 0.0
        %690 = vmatpush1.msra.mxu0 0.0
        %691 = vmatprep.subr.mxu0 0.0
        %692 = vmatpush1.msra.mxu0 0.0
        %693 = vmatprep.subr.mxu0 0.0
        %694 = vmatpush1.msra.mxu0 0.0
        %695 = vmatprep.subr.mxu0 0.0
        %696 = vmatpush1.msra.mxu0 0.0
        %697 = vmatprep.subr.mxu0 0.0
        %698 = vmatpush1.msra.mxu0 0.0
        %699 = vmatprep.subr.mxu0 0.0
        %700 = vmatpush1.msra.mxu0 0.0
        %701 = vmatprep.subr.mxu0 0.0
        %702 = vmatpush1.msra.mxu0 0.0
        %703 = vmatprep.subr.mxu0 0.0
        %704 = vmatpush1.msra.mxu0 0.0
        %705 = vmatprep.subr.mxu0 0.0
        %706 = vmatpush1.msra.mxu0 0.0
        %707 = vmatprep.subr.mxu0 0.0
        %708 = vmatpush1.msra.mxu0 0.0
        %709 = vmatprep.subr.mxu0 0.0
        %710 = vmatpush1.msra.mxu0 0.0
        %711 = vmatprep.subr.mxu0 0.0
        %712 = vmatpush1.msra.mxu0 0.0
        %713 = vmatprep.subr.mxu0 0.0
        %714 = vmatpush1.msra.mxu0 0.0
        %715 = vmatprep.subr.mxu0 0.0
        %716 = vmatpush1.msra.mxu0 0.0
        %717 = vmatprep.subr.mxu0 0.0
        %718 = vmatpush1.msra.mxu0 0.0
        %719 = vmatprep.subr.mxu0 0.0
        %720 = vmatpush1.msra.mxu0 0.0
        %721 = vmatprep.subr.mxu0 0.0
        %722 = vmatpush1.msra.mxu0 0.0
        %723 = vmatprep.subr.mxu0 0.0
        %724 = vmatpush1.msra.mxu0 0.0
        %725 = vmatprep.subr.mxu0 0.0
        %726 = vmatpush1.msra.mxu0 0.0
        %727 = vmatprep.subr.mxu0 0.0
        %728 = vmatpush1.msra.mxu0 0.0
        %729 = vmatprep.subr.mxu0 0.0
        %730 = vmatpush1.msra.mxu0 0.0
        %731 = vmatprep.subr.mxu0 0.0
        %732 = vmatpush1.msra.mxu0 0.0
        %733 = vmatprep.subr.mxu0 0.0
        %734 = vmatpush1.msra.mxu0 0.0
        %735 = vmatprep.subr.mxu0 0.0
        %736 = vmatpush1.msra.mxu0 0.0
        %737 = vmatprep.subr.mxu0 0.0
        %738 = vmatpush1.msra.mxu0 0.0
        %739 = vmatprep.subr.mxu0 0.0
        %740 = vmatpush1.msra.mxu0 0.0
        %741 = vmatprep.subr.mxu0 0.0
        %742 = vmatpush1.msra.mxu0 0.0
        %743 = vmatprep.subr.mxu0 0.0
        %744 = vmatpush1.msra.mxu0 0.0
        %745 = vmatprep.subr.mxu0 0.0
        %746 = vmatpush1.msra.mxu0 0.0
        %747 = vmatprep.mubr.f32.mxu0 0.0
        %748 = vmatmul.mubr.f32.gmra.mrb[0].mxu0 %v681
        %v749 = vpop.f32.mrb[0].mxu0
        %v750 = vadd.f32 0.0, %v749
        %v751 = vpop.f32.mrb[0].mxu0
        %752 = vdwg.mxu0
        %v754 = vsel %vm643, %v663, 0
        %756 = vmatprep.subr.mxu0 0.0
        %757 = vmatpush1.msra.mxu0 %v315
        %758 = vmatprep.subr.mxu0 0.0
        %759 = vmatpush1.msra.mxu0 0.0
        %760 = vmatprep.subr.mxu0 0.0
        %761 = vmatpush1.msra.mxu0 0.0
        %762 = vmatprep.subr.mxu0 0.0
        %763 = vmatpush1.msra.mxu0 0.0
        %764 = vmatprep.subr.mxu0 0.0
        %765 = vmatpush1.msra.mxu0 0.0
        %766 = vmatprep.subr.mxu0 0.0
        %767 = vmatpush1.msra.mxu0 0.0
        %768 = vmatprep.subr.mxu0 0.0
        %769 = vmatpush1.msra.mxu0 0.0
        %770 = vmatprep.subr.mxu0 0.0
        %771 = vmatpush1.msra.mxu0 0.0
        %772 = vmatprep.subr.mxu0 0.0
        %773 = vmatpush1.msra.mxu0 0.0
        %774 = vmatprep.subr.mxu0 0.0
        %775 = vmatpush1.msra.mxu0 0.0
        %776 = vmatprep.subr.mxu0 0.0
        %777 = vmatpush1.msra.mxu0 0.0
        %778 = vmatprep.subr.mxu0 0.0
        %779 = vmatpush1.msra.mxu0 0.0
        %780 = vmatprep.subr.mxu0 0.0
        %781 = vmatpush1.msra.mxu0 0.0
        %782 = vmatprep.subr.mxu0 0.0
        %783 = vmatpush1.msra.mxu0 0.0
        %784 = vmatprep.subr.mxu0 0.0
        %785 = vmatpush1.msra.mxu0 0.0
        %786 = vmatprep.subr.mxu0 0.0
        %787 = vmatpush1.msra.mxu0 0.0
        %788 = vmatprep.subr.mxu0 0.0
        %789 = vmatpush1.msra.mxu0 0.0
        %790 = vmatprep.subr.mxu0 0.0
        %791 = vmatpush1.msra.mxu0 0.0
        %792 = vmatprep.subr.mxu0 0.0
        %793 = vmatpush1.msra.mxu0 0.0
        %794 = vmatprep.subr.mxu0 0.0
        %795 = vmatpush1.msra.mxu0 0.0
        %796 = vmatprep.subr.mxu0 0.0
        %797 = vmatpush1.msra.mxu0 0.0
        %798 = vmatprep.subr.mxu0 0.0
        %799 = vmatpush1.msra.mxu0 0.0
        %800 = vmatprep.subr.mxu0 0.0
        %801 = vmatpush1.msra.mxu0 0.0
        %802 = vmatprep.subr.mxu0 0.0
        %803 = vmatpush1.msra.mxu0 0.0
        %804 = vmatprep.subr.mxu0 0.0
        %805 = vmatpush1.msra.mxu0 0.0
        %806 = vmatprep.subr.mxu0 0.0
        %807 = vmatpush1.msra.mxu0 0.0
        %808 = vmatprep.subr.mxu0 0.0
        %809 = vmatpush1.msra.mxu0 0.0
        %810 = vmatprep.subr.mxu0 0.0
        %811 = vmatpush1.msra.mxu0 0.0
        %812 = vmatprep.subr.mxu0 0.0
        %813 = vmatpush1.msra.mxu0 0.0
        %814 = vmatprep.subr.mxu0 0.0
        %815 = vmatpush1.msra.mxu0 0.0
        %816 = vmatprep.subr.mxu0 0.0
        %817 = vmatpush1.msra.mxu0 0.0
        %818 = vmatprep.subr.mxu0 0.0
        %819 = vmatpush1.msra.mxu0 0.0
        %820 = vmatprep.mubr.f32.mxu0 0.0
        %821 = vmatmul.mubr.f32.gmra.mrb[0].mxu0 %v754
        %v822 = vpop.f32.mrb[0].mxu0
        %v823 = vadd.f32 0.0, %v822
        %v824 = vpop.f32.mrb[0].mxu0
        %825 = vdwg.mxu0
        %v827 = vsel %vm643, %v665, 0
        %829 = vmatprep.subr.mxu0 0.0
        %830 = vmatpush1.msra.mxu0 %v318
        %831 = vmatprep.subr.mxu0 0.0
        %832 = vmatpush1.msra.mxu0 0.0
        %833 = vmatprep.subr.mxu0 0.0
        %834 = vmatpush1.msra.mxu0 0.0
        %835 = vmatprep.subr.mxu0 0.0
        %836 = vmatpush1.msra.mxu0 0.0
        %837 = vmatprep.subr.mxu0 0.0
        %838 = vmatpush1.msra.mxu0 0.0
        %839 = vmatprep.subr.mxu0 0.0
        %840 = vmatpush1.msra.mxu0 0.0
        %841 = vmatprep.subr.mxu0 0.0
        %842 = vmatpush1.msra.mxu0 0.0
        %843 = vmatprep.subr.mxu0 0.0
        %844 = vmatpush1.msra.mxu0 0.0
        %845 = vmatprep.subr.mxu0 0.0
        %846 = vmatpush1.msra.mxu0 0.0
        %847 = vmatprep.subr.mxu0 0.0
        %848 = vmatpush1.msra.mxu0 0.0
        %849 = vmatprep.subr.mxu0 0.0
        %850 = vmatpush1.msra.mxu0 0.0
        %851 = vmatprep.subr.mxu0 0.0
        %852 = vmatpush1.msra.mxu0 0.0
        %853 = vmatprep.subr.mxu0 0.0
        %854 = vmatpush1.msra.mxu0 0.0
        %855 = vmatprep.subr.mxu0 0.0
        %856 = vmatpush1.msra.mxu0 0.0
        %857 = vmatprep.subr.mxu0 0.0
        %858 = vmatpush1.msra.mxu0 0.0
        %859 = vmatprep.subr.mxu0 0.0
        %860 = vmatpush1.msra.mxu0 0.0
        %861 = vmatprep.subr.mxu0 0.0
        %862 = vmatpush1.msra.mxu0 0.0
        %863 = vmatprep.subr.mxu0 0.0
        %864 = vmatpush1.msra.mxu0 0.0
        %865 = vmatprep.subr.mxu0 0.0
        %866 = vmatpush1.msra.mxu0 0.0
        %867 = vmatprep.subr.mxu0 0.0
        %868 = vmatpush1.msra.mxu0 0.0
        %869 = vmatprep.subr.mxu0 0.0
        %870 = vmatpush1.msra.mxu0 0.0
        %871 = vmatprep.subr.mxu0 0.0
        %872 = vmatpush1.msra.mxu0 0.0
        %873 = vmatprep.subr.mxu0 0.0
        %874 = vmatpush1.msra.mxu0 0.0
        %875 = vmatprep.subr.mxu0 0.0
        %876 = vmatpush1.msra.mxu0 0.0
        %877 = vmatprep.subr.mxu0 0.0
        %878 = vmatpush1.msra.mxu0 0.0
        %879 = vmatprep.subr.mxu0 0.0
        %880 = vmatpush1.msra.mxu0 0.0
        %881 = vmatprep.subr.mxu0 0.0
        %882 = vmatpush1.msra.mxu0 0.0
        %883 = vmatprep.subr.mxu0 0.0
        %884 = vmatpush1.msra.mxu0 0.0
        %885 = vmatprep.subr.mxu0 0.0
        %886 = vmatpush1.msra.mxu0 0.0
        %887 = vmatprep.subr.mxu0 0.0
        %888 = vmatpush1.msra.mxu0 0.0
        %889 = vmatprep.subr.mxu0 0.0
        %890 = vmatpush1.msra.mxu0 0.0
        %891 = vmatprep.subr.mxu0 0.0
        %892 = vmatpush1.msra.mxu0 0.0
        %893 = vmatprep.mubr.f32.mxu0 0.0
        %894 = vmatmul.mubr.f32.gmra.mrb[0].mxu0 %v827
        %v895 = vpop.f32.mrb[0].mxu0
        %v896 = vadd.f32 0.0, %v895
        %v897 = vpop.f32.mrb[0].mxu0
        %898 = vdwg.mxu0
        %v900 = vsel %vm643, %v667, 0
        %902 = vmatprep.subr.mxu0 0.0
        %903 = vmatpush1.msra.mxu0 %v321
        %904 = vmatprep.subr.mxu0 0.0
        %905 = vmatpush1.msra.mxu0 0.0
        %906 = vmatprep.subr.mxu0 0.0
        %907 = vmatpush1.msra.mxu0 0.0
        %908 = vmatprep.subr.mxu0 0.0
        %909 = vmatpush1.msra.mxu0 0.0
        %910 = vmatprep.subr.mxu0 0.0
        %911 = vmatpush1.msra.mxu0 0.0
        %912 = vmatprep.subr.mxu0 0.0
        %913 = vmatpush1.msra.mxu0 0.0
        %914 = vmatprep.subr.mxu0 0.0
        %915 = vmatpush1.msra.mxu0 0.0
        %916 = vmatprep.subr.mxu0 0.0
        %917 = vmatpush1.msra.mxu0 0.0
        %918 = vmatprep.subr.mxu0 0.0
        %919 = vmatpush1.msra.mxu0 0.0
        %920 = vmatprep.subr.mxu0 0.0
        %921 = vmatpush1.msra.mxu0 0.0
        %922 = vmatprep.subr.mxu0 0.0
        %923 = vmatpush1.msra.mxu0 0.0
        %924 = vmatprep.subr.mxu0 0.0
        %925 = vmatpush1.msra.mxu0 0.0
        %926 = vmatprep.subr.mxu0 0.0
        %927 = vmatpush1.msra.mxu0 0.0
        %928 = vmatprep.subr.mxu0 0.0
        %929 = vmatpush1.msra.mxu0 0.0
        %930 = vmatprep.subr.mxu0 0.0
        %931 = vmatpush1.msra.mxu0 0.0
        %932 = vmatprep.subr.mxu0 0.0
        %933 = vmatpush1.msra.mxu0 0.0
        %934 = vmatprep.subr.mxu0 0.0
        %935 = vmatpush1.msra.mxu0 0.0
        %936 = vmatprep.subr.mxu0 0.0
        %937 = vmatpush1.msra.mxu0 0.0
        %938 = vmatprep.subr.mxu0 0.0
        %939 = vmatpush1.msra.mxu0 0.0
        %940 = vmatprep.subr.mxu0 0.0
        %941 = vmatpush1.msra.mxu0 0.0
        %942 = vmatprep.subr.mxu0 0.0
        %943 = vmatpush1.msra.mxu0 0.0
        %944 = vmatprep.subr.mxu0 0.0
        %945 = vmatpush1.msra.mxu0 0.0
        %946 = vmatprep.subr.mxu0 0.0
        %947 = vmatpush1.msra.mxu0 0.0
        %948 = vmatprep.subr.mxu0 0.0
        %949 = vmatpush1.msra.mxu0 0.0
        %950 = vmatprep.subr.mxu0 0.0
        %951 = vmatpush1.msra.mxu0 0.0
        %952 = vmatprep.subr.mxu0 0.0
        %953 = vmatpush1.msra.mxu0 0.0
        %954 = vmatprep.subr.mxu0 0.0
        %955 = vmatpush1.msra.mxu0 0.0
        %956 = vmatprep.subr.mxu0 0.0
        %957 = vmatpush1.msra.mxu0 0.0
        %958 = vmatprep.subr.mxu0 0.0
        %959 = vmatpush1.msra.mxu0 0.0
        %960 = vmatprep.subr.mxu0 0.0
        %961 = vmatpush1.msra.mxu0 0.0
        %962 = vmatprep.subr.mxu0 0.0
        %963 = vmatpush1.msra.mxu0 0.0
        %964 = vmatprep.subr.mxu0 0.0
        %965 = vmatpush1.msra.mxu0 0.0
        %966 = vmatprep.mubr.f32.mxu0 0.0
        %967 = vmatmul.mubr.f32.gmra.mrb[0].mxu0 %v900
        %v968 = vpop.f32.mrb[0].mxu0
        %v969 = vadd.f32 0.0, %v968
        %v970 = vpop.f32.mrb[0].mxu0
        %971 = vdwg.mxu0
        %v972 = vrcp.pop %v670
        %v973 = vrcp.pop %v673
        %v974 = vrcp.pop %v676
        %v975 = vrcp.pop %v679
        %v976 = vmul.f32 %v750, %v972
        %v977 = vmul.f32 %v823, %v973
        %v978 = vmul.f32 %v896, %v974
        %v979 = vmul.f32 %v969, %v975
        %v980 = vld [vmem:[%s4] sm:$0x1]
        %v981 = vld [vmem:[%s3] sm:$0xff]
        %v982 = vld [vmem:[%s3 + $0x8] sm:$0xff]
        %v984 = vsel %vm325, %v976, 0
        %986 = vmatprep.subr.mxu0 0.0
        %987 = vmatpush1.msra.mxu0 %v981
        %988 = vmatprep.subr.mxu0 0.0
        %989 = vmatpush1.msra.mxu0 %v982
        %990 = vmatprep.subr.mxu0 0.0
        %991 = vmatpush1.msra.mxu0 0.0
        %992 = vmatprep.subr.mxu0 0.0
        %993 = vmatpush1.msra.mxu0 0.0
        %994 = vmatprep.subr.mxu0 0.0
        %995 = vmatpush1.msra.mxu0 0.0
        %996 = vmatprep.subr.mxu0 0.0
        %997 = vmatpush1.msra.mxu0 0.0
        %998 = vmatprep.subr.mxu0 0.0
        %999 = vmatpush1.msra.mxu0 0.0
        %1000 = vmatprep.subr.mxu0 0.0
        %1001 = vmatpush1.msra.mxu0 0.0
        %1002 = vmatprep.subr.mxu0 0.0
        %1003 = vmatpush1.msra.mxu0 0.0
        %1004 = vmatprep.subr.mxu0 0.0
        %1005 = vmatpush1.msra.mxu0 0.0
        %1006 = vmatprep.subr.mxu0 0.0
        %1007 = vmatpush1.msra.mxu0 0.0
        %1008 = vmatprep.subr.mxu0 0.0
        %1009 = vmatpush1.msra.mxu0 0.0
        %1010 = vmatprep.subr.mxu0 0.0
        %1011 = vmatpush1.msra.mxu0 0.0
        %1012 = vmatprep.subr.mxu0 0.0
        %1013 = vmatpush1.msra.mxu0 0.0
        %1014 = vmatprep.subr.mxu0 0.0
        %1015 = vmatpush1.msra.mxu0 0.0
        %1016 = vmatprep.subr.mxu0 0.0
        %1017 = vmatpush1.msra.mxu0 0.0
        %1018 = vmatprep.subr.mxu0 0.0
        %1019 = vmatpush1.msra.mxu0 0.0
        %1020 = vmatprep.subr.mxu0 0.0
        %1021 = vmatpush1.msra.mxu0 0.0
        %1022 = vmatprep.subr.mxu0 0.0
        %1023 = vmatpush1.msra.mxu0 0.0
        %1024 = vmatprep.subr.mxu0 0.0
        %1025 = vmatpush1.msra.mxu0 0.0
        %1026 = vmatprep.subr.mxu0 0.0
        %1027 = vmatpush1.msra.mxu0 0.0
        %1028 = vmatprep.subr.mxu0 0.0
        %1029 = vmatpush1.msra.mxu0 0.0
        %1030 = vmatprep.subr.mxu0 0.0
        %1031 = vmatpush1.msra.mxu0 0.0
        %1032 = vmatprep.subr.mxu0 0.0
        %1033 = vmatpush1.msra.mxu0 0.0
        %1034 = vmatprep.subr.mxu0 0.0
        %1035 = vmatpush1.msra.mxu0 0.0
        %1036 = vmatprep.subr.mxu0 0.0
        %1037 = vmatpush1.msra.mxu0 0.0
        %1038 = vmatprep.subr.mxu0 0.0
        %1039 = vmatpush1.msra.mxu0 0.0
        %1040 = vmatprep.subr.mxu0 0.0
        %1041 = vmatpush1.msra.mxu0 0.0
        %1042 = vmatprep.subr.mxu0 0.0
        %1043 = vmatpush1.msra.mxu0 0.0
        %1044 = vmatprep.subr.mxu0 0.0
        %1045 = vmatpush1.msra.mxu0 0.0
        %1046 = vmatprep.subr.mxu0 0.0
        %1047 = vmatpush1.msra.mxu0 0.0
        %1048 = vmatprep.subr.mxu0 0.0
        %1049 = vmatpush1.msra.mxu0 0.0
        %1050 = vmatprep.mubr.f32.mxu0 0.0
        %1051 = vmatmul.mubr.f32.gmra.mrb[0].mxu0 %v984
        %v1052 = vpop.f32.mrb[0].mxu0
        %v1053 = vadd.f32 0.0, %v1052
        %v1054 = vpop.f32.mrb[0].mxu0
        %1055 = vdwg.mxu0
        %v1057 = vlaneseq
        %v1058 = vshrl.u32 %v1057, 7
        %v1059 = vsub.s32 0, %v1058
        %v1060 = vrot.slane %v980, %v1059
        %v1062 = vadd.f32 %v1060, %v1053
        %v1063 = vld [vmem:[%s3 + $0x10] sm:$0xff]
        %v1064 = vld [vmem:[%s3 + $0x18] sm:$0xff]
        %v1066 = vsel %vm325, %v977, 0
        %1068 = vmatprep.subr.mxu0 0.0
        %1069 = vmatpush1.msra.mxu0 %v1063
        %1070 = vmatprep.subr.mxu0 0.0
        %1071 = vmatpush1.msra.mxu0 %v1064
        %1072 = vmatprep.subr.mxu0 0.0
        %1073 = vmatpush1.msra.mxu0 0.0
        %1074 = vmatprep.subr.mxu0 0.0
        %1075 = vmatpush1.msra.mxu0 0.0
        %1076 = vmatprep.subr.mxu0 0.0
        %1077 = vmatpush1.msra.mxu0 0.0
        %1078 = vmatprep.subr.mxu0 0.0
        %1079 = vmatpush1.msra.mxu0 0.0
        %1080 = vmatprep.subr.mxu0 0.0
        %1081 = vmatpush1.msra.mxu0 0.0
        %1082 = vmatprep.subr.mxu0 0.0
        %1083 = vmatpush1.msra.mxu0 0.0
        %1084 = vmatprep.subr.mxu0 0.0
        %1085 = vmatpush1.msra.mxu0 0.0
        %1086 = vmatprep.subr.mxu0 0.0
        %1087 = vmatpush1.msra.mxu0 0.0
        %1088 = vmatprep.subr.mxu0 0.0
        %1089 = vmatpush1.msra.mxu0 0.0
        %1090 = vmatprep.subr.mxu0 0.0
        %1091 = vmatpush1.msra.mxu0 0.0
        %1092 = vmatprep.subr.mxu0 0.0
        %1093 = vmatpush1.msra.mxu0 0.0
        %1094 = vmatprep.subr.mxu0 0.0
        %1095 = vmatpush1.msra.mxu0 0.0
        %1096 = vmatprep.subr.mxu0 0.0
        %1097 = vmatpush1.msra.mxu0 0.0
        %1098 = vmatprep.subr.mxu0 0.0
        %1099 = vmatpush1.msra.mxu0 0.0
        %1100 = vmatprep.subr.mxu0 0.0
        %1101 = vmatpush1.msra.mxu0 0.0
        %1102 = vmatprep.subr.mxu0 0.0
        %1103 = vmatpush1.msra.mxu0 0.0
        %1104 = vmatprep.subr.mxu0 0.0
        %1105 = vmatpush1.msra.mxu0 0.0
        %1106 = vmatprep.subr.mxu0 0.0
        %1107 = vmatpush1.msra.mxu0 0.0
        %1108 = vmatprep.subr.mxu0 0.0
        %1109 = vmatpush1.msra.mxu0 0.0
        %1110 = vmatprep.subr.mxu0 0.0
        %1111 = vmatpush1.msra.mxu0 0.0
        %1112 = vmatprep.subr.mxu0 0.0
        %1113 = vmatpush1.msra.mxu0 0.0
        %1114 = vmatprep.subr.mxu0 0.0
        %1115 = vmatpush1.msra.mxu0 0.0
        %1116 = vmatprep.subr.mxu0 0.0
        %1117 = vmatpush1.msra.mxu0 0.0
        %1118 = vmatprep.subr.mxu0 0.0
        %1119 = vmatpush1.msra.mxu0 0.0
        %1120 = vmatprep.subr.mxu0 0.0
        %1121 = vmatpush1.msra.mxu0 0.0
        %1122 = vmatprep.subr.mxu0 0.0
        %1123 = vmatpush1.msra.mxu0 0.0
        %1124 = vmatprep.subr.mxu0 0.0
        %1125 = vmatpush1.msra.mxu0 0.0
        %1126 = vmatprep.subr.mxu0 0.0
        %1127 = vmatpush1.msra.mxu0 0.0
        %1128 = vmatprep.subr.mxu0 0.0
        %1129 = vmatpush1.msra.mxu0 0.0
        %1130 = vmatprep.subr.mxu0 0.0
        %1131 = vmatpush1.msra.mxu0 0.0
        %1132 = vmatprep.mubr.f32.mxu0 0.0
        %1133 = vmatmul.mubr.f32.gmra.mrb[0].mxu0 %v1066
        %v1134 = vpop.f32.mrb[0].mxu0
        %v1135 = vadd.f32 0.0, %v1134
        %v1136 = vpop.f32.mrb[0].mxu0
        %1137 = vdwg.mxu0
        %v1138 = vadd.f32 %v1062, %v1135
        %v1139 = vld [vmem:[%s3 + $0x20] sm:$0xff]
        %v1140 = vld [vmem:[%s3 + $0x28] sm:$0xff]
        %v1142 = vsel %vm325, %v978, 0
        %1144 = vmatprep.subr.mxu0 0.0
        %1145 = vmatpush1.msra.mxu0 %v1139
        %1146 = vmatprep.subr.mxu0 0.0
        %1147 = vmatpush1.msra.mxu0 %v1140
        %1148 = vmatprep.subr.mxu0 0.0
        %1149 = vmatpush1.msra.mxu0 0.0
        %1150 = vmatprep.subr.mxu0 0.0
        %1151 = vmatpush1.msra.mxu0 0.0
        %1152 = vmatprep.subr.mxu0 0.0
        %1153 = vmatpush1.msra.mxu0 0.0
        %1154 = vmatprep.subr.mxu0 0.0
        %1155 = vmatpush1.msra.mxu0 0.0
        %1156 = vmatprep.subr.mxu0 0.0
        %1157 = vmatpush1.msra.mxu0 0.0
        %1158 = vmatprep.subr.mxu0 0.0
        %1159 = vmatpush1.msra.mxu0 0.0
        %1160 = vmatprep.subr.mxu0 0.0
        %1161 = vmatpush1.msra.mxu0 0.0
        %1162 = vmatprep.subr.mxu0 0.0
        %1163 = vmatpush1.msra.mxu0 0.0
        %1164 = vmatprep.subr.mxu0 0.0
        %1165 = vmatpush1.msra.mxu0 0.0
        %1166 = vmatprep.subr.mxu0 0.0
        %1167 = vmatpush1.msra.mxu0 0.0
        %1168 = vmatprep.subr.mxu0 0.0
        %1169 = vmatpush1.msra.mxu0 0.0
        %1170 = vmatprep.subr.mxu0 0.0
        %1171 = vmatpush1.msra.mxu0 0.0
        %1172 = vmatprep.subr.mxu0 0.0
        %1173 = vmatpush1.msra.mxu0 0.0
        %1174 = vmatprep.subr.mxu0 0.0
        %1175 = vmatpush1.msra.mxu0 0.0
        %1176 = vmatprep.subr.mxu0 0.0
        %1177 = vmatpush1.msra.mxu0 0.0
        %1178 = vmatprep.subr.mxu0 0.0
        %1179 = vmatpush1.msra.mxu0 0.0
        %1180 = vmatprep.subr.mxu0 0.0
        %1181 = vmatpush1.msra.mxu0 0.0
        %1182 = vmatprep.subr.mxu0 0.0
        %1183 = vmatpush1.msra.mxu0 0.0
        %1184 = vmatprep.subr.mxu0 0.0
        %1185 = vmatpush1.msra.mxu0 0.0
        %1186 = vmatprep.subr.mxu0 0.0
        %1187 = vmatpush1.msra.mxu0 0.0
        %1188 = vmatprep.subr.mxu0 0.0
        %1189 = vmatpush1.msra.mxu0 0.0
        %1190 = vmatprep.subr.mxu0 0.0
        %1191 = vmatpush1.msra.mxu0 0.0
        %1192 = vmatprep.subr.mxu0 0.0
        %1193 = vmatpush1.msra.mxu0 0.0
        %1194 = vmatprep.subr.mxu0 0.0
        %1195 = vmatpush1.msra.mxu0 0.0
        %1196 = vmatprep.subr.mxu0 0.0
        %1197 = vmatpush1.msra.mxu0 0.0
        %1198 = vmatprep.subr.mxu0 0.0
        %1199 = vmatpush1.msra.mxu0 0.0
        %1200 = vmatprep.subr.mxu0 0.0
        %1201 = vmatpush1.msra.mxu0 0.0
        %1202 = vmatprep.subr.mxu0 0.0
        %1203 = vmatpush1.msra.mxu0 0.0
        %1204 = vmatprep.subr.mxu0 0.0
        %1205 = vmatpush1.msra.mxu0 0.0
        %1206 = vmatprep.subr.mxu0 0.0
        %1207 = vmatpush1.msra.mxu0 0.0
        %1208 = vmatprep.mubr.f32.mxu0 0.0
        %1209 = vmatmul.mubr.f32.gmra.mrb[0].mxu0 %v1142
        %v1210 = vpop.f32.mrb[0].mxu0
        %v1211 = vadd.f32 0.0, %v1210
        %v1212 = vpop.f32.mrb[0].mxu0
        %1213 = vdwg.mxu0
        %v1214 = vadd.f32 %v1138, %v1211
        %v1215 = vld [vmem:[%s3 + $0x30] sm:$0xff]
        %v1216 = vld [vmem:[%s3 + $0x38] sm:$0xff]
        %v1218 = vsel %vm325, %v979, 0
        %1220 = vmatprep.subr.mxu0 0.0
        %1221 = vmatpush1.msra.mxu0 %v1215
        %1222 = vmatprep.subr.mxu0 0.0
        %1223 = vmatpush1.msra.mxu0 %v1216
        %1224 = vmatprep.subr.mxu0 0.0
        %1225 = vmatpush1.msra.mxu0 0.0
        %1226 = vmatprep.subr.mxu0 0.0
        %1227 = vmatpush1.msra.mxu0 0.0
        %1228 = vmatprep.subr.mxu0 0.0
        %1229 = vmatpush1.msra.mxu0 0.0
        %1230 = vmatprep.subr.mxu0 0.0
        %1231 = vmatpush1.msra.mxu0 0.0
        %1232 = vmatprep.subr.mxu0 0.0
        %1233 = vmatpush1.msra.mxu0 0.0
        %1234 = vmatprep.subr.mxu0 0.0
        %1235 = vmatpush1.msra.mxu0 0.0
        %1236 = vmatprep.subr.mxu0 0.0
        %1237 = vmatpush1.msra.mxu0 0.0
        %1238 = vmatprep.subr.mxu0 0.0
        %1239 = vmatpush1.msra.mxu0 0.0
        %1240 = vmatprep.subr.mxu0 0.0
        %1241 = vmatpush1.msra.mxu0 0.0
        %1242 = vmatprep.subr.mxu0 0.0
        %1243 = vmatpush1.msra.mxu0 0.0
        %1244 = vmatprep.subr.mxu0 0.0
        %1245 = vmatpush1.msra.mxu0 0.0
        %1246 = vmatprep.subr.mxu0 0.0
        %1247 = vmatpush1.msra.mxu0 0.0
        %1248 = vmatprep.subr.mxu0 0.0
        %1249 = vmatpush1.msra.mxu0 0.0
        %1250 = vmatprep.subr.mxu0 0.0
        %1251 = vmatpush1.msra.mxu0 0.0
        %1252 = vmatprep.subr.mxu0 0.0
        %1253 = vmatpush1.msra.mxu0 0.0
        %1254 = vmatprep.subr.mxu0 0.0
        %1255 = vmatpush1.msra.mxu0 0.0
        %1256 = vmatprep.subr.mxu0 0.0
        %1257 = vmatpush1.msra.mxu0 0.0
        %1258 = vmatprep.subr.mxu0 0.0
        %1259 = vmatpush1.msra.mxu0 0.0
        %1260 = vmatprep.subr.mxu0 0.0
        %1261 = vmatpush1.msra.mxu0 0.0
        %1262 = vmatprep.subr.mxu0 0.0
        %1263 = vmatpush1.msra.mxu0 0.0
        %1264 = vmatprep.subr.mxu0 0.0
        %1265 = vmatpush1.msra.mxu0 0.0
        %1266 = vmatprep.subr.mxu0 0.0
        %1267 = vmatpush1.msra.mxu0 0.0
        %1268 = vmatprep.subr.mxu0 0.0
        %1269 = vmatpush1.msra.mxu0 0.0
        %1270 = vmatprep.subr.mxu0 0.0
        %1271 = vmatpush1.msra.mxu0 0.0
        %1272 = vmatprep.subr.mxu0 0.0
        %1273 = vmatpush1.msra.mxu0 0.0
        %1274 = vmatprep.subr.mxu0 0.0
        %1275 = vmatpush1.msra.mxu0 0.0
        %1276 = vmatprep.subr.mxu0 0.0
        %1277 = vmatpush1.msra.mxu0 0.0
        %1278 = vmatprep.subr.mxu0 0.0
        %1279 = vmatpush1.msra.mxu0 0.0
        %1280 = vmatprep.subr.mxu0 0.0
        %1281 = vmatpush1.msra.mxu0 0.0
        %1282 = vmatprep.subr.mxu0 0.0
        %1283 = vmatpush1.msra.mxu0 0.0
        %1284 = vmatprep.mubr.f32.mxu0 0.0
        %1285 = vmatmul.mubr.f32.gmra.mrb[0].mxu0 %v1218
        %v1286 = vpop.f32.mrb[0].mxu0
        %v1287 = vadd.f32 0.0, %v1286
        %v1288 = vpop.f32.mrb[0].mxu0
        %1289 = vdwg.mxu0
        %v1290 = vadd.f32 %v1214, %v1287
        %1291 = vst.msk [vmem:[%s216] sm:$0xff] %vm231, %v1290
        %s1292 = sand.u32 %s138, 1
        %s1293 = scalar_lea.sflag [#allocation4], %s1292
        %s1294 = sand.u32 %s138, 1
        %s1295 = smul.addr %s1294, 8
        %s1296 = scalar_lea.vmem [#allocation3], %s1295
        // Predicated region
        $region41: #{tpu_custom_call.1} parent=39 // pred_check
          %p1297 = pneg %p148
        $region42: #{tpu_custom_call.1} parent=39 // pred_check_branch
          %1299 = sbr.rel (%p1297) target = $region44
        $region43: #{tpu_custom_call.1} parent=39 // pred_region
          %s1301 = ssub.s32 128, 128
          %1302 = vsyncadd %s1293, %s1301
          %s1303 = smul.addr %s20, 128
          %s1304 = scalar_lea.hbm %s5, %s1303
          %s1306 = sshll.u32 %s1296, 4
          %s1307 = int_to_ptr.vmem [resolvable:$true] %s1306
          %1309 = dma.vmem_to_hbm [thread:$0]  %s1307, 128, %s1304, %s1293
        $region44: #{tpu_custom_call.1} parent=39 // pred_fallthru
          _
      $region40: #{tpu_custom_call.1} parent=5 // pred_fallthru
        _
      %p1310 = scmp.le.s32.totalorder 2, %s15
      // Predicated region
      $region45: #{tpu_custom_call.1} parent=5 // pred_check
        %p1311 = pneg %p1310
      $region46: #{tpu_custom_call.1} parent=5 // pred_check_branch
        %1313 = sbr.rel (%p1311) target = $region48
      $region47: #{tpu_custom_call.1} parent=5 // pred_region
        %s1314 = ssub.s32 %s15, 2
        // Predicated region
        $region49: #{tpu_custom_call.1} parent=47 // pred_check
          %p1315 = pneg %p154
        $region50: #{tpu_custom_call.1} parent=47 // pred_check_branch
          %1317 = sbr.rel (%p1315) target = $region52
        $region51: #{tpu_custom_call.1} parent=47 // pred_region
          %s1318 = sand.u32 %s139, 1
          %s1319 = scalar_lea.sflag [#allocation4], %s1318
          %s1320 = sand.u32 %s139, 1
          %s1321 = smul.addr %s1320, 8
          %s1322 = scalar_lea.vmem [#allocation3], %s1321
          %1323 = dma.done %s1319, 128
        $region52: #{tpu_custom_call.1} parent=47 // pred_fallthru
          _
      $region48: #{tpu_custom_call.1} parent=5 // pred_fallthru
        _
    $region6: #{tpu_custom_call.1} parent=1 // loop_footer
      %s19 = sadd.s32 1, %s15
    $region7: #{tpu_custom_call.1} parent=1 // loop_footer_branch
      %14 = sbr.rel target = $region3
    $region8: #{tpu_custom_call.1} parent=1 // loop_exit
      _
    %1324 = vsyncpa [#allocation4], 1
    %s1325 = scalar_lea.sflag [#allocation4], 1
    %1326 = vsyncpa %s1325, 1

</llo_original>
